<compile_context>
chip_gen: v7x
topology: tpu7x:2x2x1
jax: 0.10.0
libtpu: 0.0.40
codegen_flags: <defaults>
</compile_context>

<pallas_src>
import functools
import math

import jax
import jax.numpy as jnp
from jax import lax
from jax.experimental import pallas as pl
from jax.experimental.pallas import tpu as pltpu


def _attention_kernel(x_ref, w_ref, b_ref, wo_ref, bo_ref, o_ref, *,
                      n_heads, d_kq, d_val, seq_len, batch_block):
    # x_ref:  (C, Bb*S)               feature-major input, sequence on lanes
    # w_ref:  (F, C)                  fused [Wq; Wk; Wv] projection weight
    # b_ref:  (F, 1)                  fused projection bias (column vector)
    # wo_ref: (n_heads, d_out, d_val) per-head output-projection slabs
    # bo_ref: (d_out, 1)
    # o_ref:  (d_out, Bb*S)
    S = seq_len
    scale = 1.0 / math.sqrt(d_kq)            # SDPA default scale (scale=None)
    q_off = 0
    k_off = n_heads * d_kq
    v_off = 2 * n_heads * d_kq

    # Single fused projection for q, k and v of every head: (F, C) @ (C, Bb*S).
    proj = jnp.dot(w_ref[...], x_ref[...],
                   preferred_element_type=jnp.float32) + b_ref[...]

    # TODO(synk): for large spatial sizes (S >~ 2048) replace the materialised
    # per-head (S, S) softmax with flash-style KV tiling to fit v7x/v5e VMEM.
    for b in range(batch_block):             # static; lane slices are S-aligned (>=128)
        c0, c1 = b * S, (b + 1) * S
        acc = None
        for h in range(n_heads):             # static; row slices land on 8-sublane tiles
            qh = proj[q_off + h * d_kq:q_off + (h + 1) * d_kq, c0:c1] * scale
            kh = proj[k_off + h * d_kq:k_off + (h + 1) * d_kq, c0:c1]
            vh = proj[v_off + h * d_val:v_off + (h + 1) * d_val, c0:c1]

            # Scores laid out (key, query): contraction over the small d_kq
            # sublane axis of both operands (no explicit transpose), the
            # softmax reduction runs over sublanes, and p feeds the v-matmul
            # without another relayout.
            s = lax.dot_general(kh, qh, (((0,), (0,)), ((), ())),
                                preferred_element_type=jnp.float32)     # (S, S)
            m = jnp.max(s, axis=0, keepdims=True)                       # (1, S)
            p = jnp.exp(s - m)                                          # unnormalised
            l = jnp.sum(p, axis=0, keepdims=True)                       # (1, S)

            u = jnp.dot(vh, p, preferred_element_type=jnp.float32)      # (d_val, S)
            oh = jnp.dot(wo_ref[h], u,
                         preferred_element_type=jnp.float32)            # (d_out, S)
            # Normalisation folded in after the tiny output projection:
            # one (1, S) reciprocal instead of an (S, S) divide.
            oh = oh * pl.reciprocal(l, approx=False)
            acc = oh if acc is None else acc + oh

        out_b = acc + bo_ref[...]
        o_ref[:, c0:c1] = out_b.astype(o_ref.dtype)


def attention_block_2d(x_nchw, params, *, n_heads, d_kq, d_val, d_output,
                       batch_block=1):
    """x_nchw: (B, C, H, W) float32. Returns (B, d_output, H, W)."""
    B, C, H_sp, W_sp = x_nchw.shape
    S = W_sp * H_sp
    assert B % batch_block == 0, (B, batch_block)
    assert S % 128 == 0, ("sequence (W*H) must be lane-aligned", S)

    # NCHW -> (B, C, W, H) -> (B, C, S) with seq index s = w*H + h (matches
    # x.transpose(1, -1) + spatial flatten in the torch module), then fold the
    # batch into the lane/sequence axis: (C, B*S).
    x_cm = jnp.transpose(x_nchw, (0, 1, 3, 2)).reshape(B, C, S)
    x_cm = jnp.transpose(x_cm, (1, 0, 2)).reshape(C, B * S)

    # nn.Linear weights are (out_features, in_features) -- exactly the
    # feature-major orientation the kernel wants, so no weight transposes.
    w_all = jnp.concatenate([params["wkq"], params["wv"]], axis=0)    # (F, C)
    b_all = jnp.concatenate([params["bkq"], params["bv"]])[:, None]   # (F, 1)
    # Per-head output-projection slabs, sliced at trace time (free).
    wo_heads = params["wo"].reshape(d_output, n_heads, d_val)
    wo_heads = jnp.transpose(wo_heads, (1, 0, 2))                     # (H, d_out, d_val)
    bo_col = params["bo"][:, None]                                    # (d_out, 1)

    blk_s = batch_block * S
    kernel = functools.partial(
        _attention_kernel, n_heads=n_heads, d_kq=d_kq, d_val=d_val,
        seq_len=S, batch_block=batch_block)

    full = lambda a: pl.BlockSpec(a.shape, lambda g: (0,) * a.ndim)

    out_cm = pl.pallas_call(
        kernel,
        out_shape=jax.ShapeDtypeStruct((d_output, B * S), x_nchw.dtype),
        grid_spec=pltpu.PrefetchScalarGridSpec(
            num_scalar_prefetch=0,
            grid=(B // batch_block,),
            in_specs=[
                pl.BlockSpec((C, blk_s), lambda g: (0, g)),
                full(w_all), full(b_all), full(wo_heads), full(bo_col),
            ],
            out_specs=pl.BlockSpec((d_output, blk_s), lambda g: (0, g)),
        ),
        compiler_params=pltpu.CompilerParams(
            dimension_semantics=("parallel",),
            # Explicit cap: safe on v5e/v6e (128 MiB phys) and v7x (64 MiB),
            # and raises v5e's 16 MiB scoped default when S grows.
            vmem_limit_bytes=32 * 1024 * 1024),
    )(x_cm, w_all, b_all, wo_heads, bo_col)

    # (d_out, B*S) -> (B, d_out, S) -> (B, d_out, W, H) -> (B, d_out, H, W)
    out = jnp.transpose(out_cm.reshape(d_output, B, S), (1, 0, 2))
    out = out.reshape(B, d_output, W_sp, H_sp)
    return jnp.transpose(out, (0, 1, 3, 2))


def reference_attention_block_2d(x_nchw, params, *, n_heads, d_kq, d_val, d_output):
    """Pure-JAX reference mirroring the PyTorch forward."""
    B, C, H, W = x_nchw.shape
    x = jnp.transpose(x_nchw, (0, 3, 2, 1))                  # (B, W, H, C)
    kq = x @ params["wkq"].T + params["bkq"]
    q, k = jnp.split(kq, 2, axis=-1)
    v = x @ params["wv"].T + params["bv"]
    S = W * H
    q = q.reshape(B, S, n_heads, d_kq).transpose(0, 2, 1, 3)
    k = k.reshape(B, S, n_heads, d_kq).transpose(0, 2, 1, 3)
    v = v.reshape(B, S, n_heads, d_val).transpose(0, 2, 1, 3)
    s = jnp.einsum("bhqd,bhkd->bhqk", q, k) / math.sqrt(d_kq)
    p = jax.nn.softmax(s, axis=-1)
    vals = jnp.einsum("bhqk,bhkd->bhqd", p, v)                # (B, H, S, d_val)
    vals = vals.transpose(0, 2, 1, 3).reshape(B, W, H, n_heads * d_val)
    out = vals @ params["wo"].T + params["bo"]
    return jnp.transpose(out, (0, 3, 2, 1))


def init_params(key, d_input, n_heads, d_kq, d_val, d_output):
    """Deterministic init matching the module's parameter shapes.

    nn.Linear weight is (out_features, in_features); xavier-normal-like init,
    biases filled with 0.01 (as in init_weights)."""
    k1, k2, k3 = jax.random.split(key, 3)

    def xavier(k, out_f, in_f):
        std = math.sqrt(2.0 / (in_f + out_f))
        return std * jax.random.normal(k, (out_f, in_f), dtype=jnp.float32)

    return {
        "wkq": xavier(k1, 2 * n_heads * d_kq, d_input),
        "bkq": jnp.full((2 * n_heads * d_kq,), 0.01, dtype=jnp.float32),
        "wv": xavier(k2, n_heads * d_val, d_input),
        "bv": jnp.full((n_heads * d_val,), 0.01, dtype=jnp.float32),
        "wo": xavier(k3, d_output, n_heads * d_val),
        "bo": jnp.full((d_output,), 0.01, dtype=jnp.float32),
    }


if __name__ == "__main__":
    B, C, H, W = 2, 4, 16, 16
    n_heads, d_kq, d_val, d_output = 2, 8, 8, 4

    key = jax.random.PRNGKey(0)
    kx, kp = jax.random.split(key)
    x = jax.random.normal(kx, (B, C, H, W), dtype=jnp.float32)
    params = init_params(kp, C, n_heads, d_kq, d_val, d_output)

    out = attention_block_2d(
        x, params, n_heads=n_heads, d_kq=d_kq, d_val=d_val, d_output=d_output)
    out = jax.block_until_ready(out)

    ref = reference_attention_block_2d(
        x, params, n_heads=n_heads, d_kq=d_kq, d_val=d_val, d_output=d_output)

    assert out.shape == (B, d_output, H, W), out.shape
    assert jnp.allclose(out, ref, atol=2e-4, rtol=2e-4), (
        float(jnp.max(jnp.abs(out - ref))))
    print("KERNEL_OK")
</pallas_src>

<mosaic_0001>
module attributes {stable_mosaic.version = 11 : i64} {
  func.func @_attention_kernel(%arg0: i32, %arg1: memref<4x256xf32, #tpu.memory_space<vmem>>, %arg2: memref<48x4xf32, #tpu.memory_space<vmem>>, %arg3: memref<48x1xf32, #tpu.memory_space<vmem>>, %arg4: memref<2x4x8xf32, #tpu.memory_space<vmem>>, %arg5: memref<4x1xf32, #tpu.memory_space<vmem>>, %arg6: memref<4x256xf32, #tpu.memory_space<vmem>>) attributes {dimension_semantics = [#tpu.dimension_semantics<parallel>], iteration_bounds = array<i64: 2>, scalar_prefetch = 0 : i64, scratch_operands = 0 : i64, tpu.core_type = #tpu.core_type<tc>, window_params = [{transform_indices = @transform_0, window_bounds = array<i64: 4, 256>}, {pipeline_mode = #tpu.pipeline_mode<synchronous>, transform_indices = @transform_1, window_bounds = array<i64: 48, 4>}, {pipeline_mode = #tpu.pipeline_mode<synchronous>, transform_indices = @transform_2, window_bounds = array<i64: 48, 1>}, {pipeline_mode = #tpu.pipeline_mode<synchronous>, transform_indices = @transform_3, window_bounds = array<i64: 2, 4, 8>}, {pipeline_mode = #tpu.pipeline_mode<synchronous>, transform_indices = @transform_4, window_bounds = array<i64: 4, 1>}, {transform_indices = @transform_5, window_bounds = array<i64: 4, 256>}]} {
    %c0 = arith.constant 0 : index
    %c0_0 = arith.constant 0 : index
    %0 = vector.load %arg2[%c0, %c0_0] : memref<48x4xf32, #tpu.memory_space<vmem>>, vector<48x4xf32>
    %c0_1 = arith.constant 0 : index
    %c0_2 = arith.constant 0 : index
    %1 = vector.load %arg1[%c0_1, %c0_2] : memref<4x256xf32, #tpu.memory_space<vmem>>, vector<4x256xf32>
    %cst = arith.constant dense<0.000000e+00> : vector<48x256xf32>
    %2 = tpu.matmul %0, %1, %cst {dimension_numbers = #tpu.dot_dimension_numbers<[1], [0], [0], [1], [0, 0, 1, 1], [], []>} : vector<48x4xf32>, vector<4x256xf32>, vector<48x256xf32> -> vector<48x256xf32>
    %c0_3 = arith.constant 0 : index
    %c0_4 = arith.constant 0 : index
    %3 = vector.load %arg3[%c0_3, %c0_4] : memref<48x1xf32, #tpu.memory_space<vmem>>, vector<48x1xf32>
    %4 = vector.broadcast %3 : vector<48x1xf32> to vector<48x256xf32>
    %5 = arith.addf %2, %4 : vector<48x256xf32>
    %6 = vector.extract_strided_slice %5 {offsets = [0, 0], sizes = [8, 256], strides = [1, 1]} : vector<48x256xf32> to vector<8x256xf32>
    %cst_5 = arith.constant 0.353553385 : f32
    %7 = vector.broadcast %cst_5 : f32 to vector<8x256xf32>
    %8 = arith.mulf %6, %7 : vector<8x256xf32>
    %9 = vector.extract_strided_slice %5 {offsets = [16, 0], sizes = [8, 256], strides = [1, 1]} : vector<48x256xf32> to vector<8x256xf32>
    %10 = vector.extract_strided_slice %5 {offsets = [32, 0], sizes = [8, 256], strides = [1, 1]} : vector<48x256xf32> to vector<8x256xf32>
    %cst_6 = arith.constant dense<0.000000e+00> : vector<256x256xf32>
    %11 = tpu.matmul %9, %8, %cst_6 {dimension_numbers = #tpu.dot_dimension_numbers<[0], [0], [1], [1], [0, 1, 1, 1], [], []>} : vector<8x256xf32>, vector<8x256xf32>, vector<256x256xf32> -> vector<256x256xf32>
    %cst_7 = arith.constant dense<0xFF800000> : vector<256xf32>
    %12 = vector.multi_reduction <maximumf>, %11, %cst_7 [0] : vector<256x256xf32> to vector<256xf32>
    %13 = vector.shape_cast %12 : vector<256xf32> to vector<1x256xf32>
    %14 = vector.broadcast %13 : vector<1x256xf32> to vector<256x256xf32>
    %15 = arith.subf %11, %14 : vector<256x256xf32>
    %16 = math.exp %15 : vector<256x256xf32>
    %cst_8 = arith.constant dense<0.000000e+00> : vector<256xf32>
    %17 = vector.multi_reduction <add>, %16, %cst_8 [0] : vector<256x256xf32> to vector<256xf32>
    %18 = vector.shape_cast %17 : vector<256xf32> to vector<1x256xf32>
    %cst_9 = arith.constant dense<0.000000e+00> : vector<8x256xf32>
    %19 = tpu.matmul %10, %16, %cst_9 {dimension_numbers = #tpu.dot_dimension_numbers<[1], [0], [0], [1], [0, 0, 1, 1], [], []>} : vector<8x256xf32>, vector<256x256xf32>, vector<8x256xf32> -> vector<8x256xf32>
    %c0_10 = arith.constant 0 : index
    %c0_11 = arith.constant 0 : index
    %c0_12 = arith.constant 0 : index
    %20 = vector.load %arg4[%c0_10, %c0_11, %c0_12] : memref<2x4x8xf32, #tpu.memory_space<vmem>>, vector<1x4x8xf32>
    %21 = vector.shape_cast %20 : vector<1x4x8xf32> to vector<4x8xf32>
    %cst_13 = arith.constant dense<0.000000e+00> : vector<4x256xf32>
    %22 = tpu.matmul %21, %19, %cst_13 {dimension_numbers = #tpu.dot_dimension_numbers<[1], [0], [0], [1], [0, 0, 1, 1], [], []>} : vector<4x8xf32>, vector<8x256xf32>, vector<4x256xf32> -> vector<4x256xf32>
    %23 = tpu.reciprocal %18 : vector<1x256xf32> -> vector<1x256xf32>
    %24 = vector.broadcast %23 : vector<1x256xf32> to vector<4x256xf32>
    %25 = arith.mulf %22, %24 : vector<4x256xf32>
    %26 = vector.extract_strided_slice %5 {offsets = [8, 0], sizes = [8, 256], strides = [1, 1]} : vector<48x256xf32> to vector<8x256xf32>
    %cst_14 = arith.constant 0.353553385 : f32
    %27 = vector.broadcast %cst_14 : f32 to vector<8x256xf32>
    %28 = arith.mulf %26, %27 : vector<8x256xf32>
    %29 = vector.extract_strided_slice %5 {offsets = [24, 0], sizes = [8, 256], strides = [1, 1]} : vector<48x256xf32> to vector<8x256xf32>
    %30 = vector.extract_strided_slice %5 {offsets = [40, 0], sizes = [8, 256], strides = [1, 1]} : vector<48x256xf32> to vector<8x256xf32>
    %cst_15 = arith.constant dense<0.000000e+00> : vector<256x256xf32>
    %31 = tpu.matmul %29, %28, %cst_15 {dimension_numbers = #tpu.dot_dimension_numbers<[0], [0], [1], [1], [0, 1, 1, 1], [], []>} : vector<8x256xf32>, vector<8x256xf32>, vector<256x256xf32> -> vector<256x256xf32>
    %cst_16 = arith.constant dense<0xFF800000> : vector<256xf32>
    %32 = vector.multi_reduction <maximumf>, %31, %cst_16 [0] : vector<256x256xf32> to vector<256xf32>
    %33 = vector.shape_cast %32 : vector<256xf32> to vector<1x256xf32>
    %34 = vector.broadcast %33 : vector<1x256xf32> to vector<256x256xf32>
    %35 = arith.subf %31, %34 : vector<256x256xf32>
    %36 = math.exp %35 : vector<256x256xf32>
    %cst_17 = arith.constant dense<0.000000e+00> : vector<256xf32>
    %37 = vector.multi_reduction <add>, %36, %cst_17 [0] : vector<256x256xf32> to vector<256xf32>
    %38 = vector.shape_cast %37 : vector<256xf32> to vector<1x256xf32>
    %cst_18 = arith.constant dense<0.000000e+00> : vector<8x256xf32>
    %39 = tpu.matmul %30, %36, %cst_18 {dimension_numbers = #tpu.dot_dimension_numbers<[1], [0], [0], [1], [0, 0, 1, 1], [], []>} : vector<8x256xf32>, vector<256x256xf32>, vector<8x256xf32> -> vector<8x256xf32>
    %c1 = arith.constant 1 : index
    %c0_19 = arith.constant 0 : index
    %c0_20 = arith.constant 0 : index
    %40 = vector.load %arg4[%c1, %c0_19, %c0_20] : memref<2x4x8xf32, #tpu.memory_space<vmem>>, vector<1x4x8xf32>
    %41 = vector.shape_cast %40 : vector<1x4x8xf32> to vector<4x8xf32>
    %cst_21 = arith.constant dense<0.000000e+00> : vector<4x256xf32>
    %42 = tpu.matmul %41, %39, %cst_21 {dimension_numbers = #tpu.dot_dimension_numbers<[1], [0], [0], [1], [0, 0, 1, 1], [], []>} : vector<4x8xf32>, vector<8x256xf32>, vector<4x256xf32> -> vector<4x256xf32>
    %43 = tpu.reciprocal %38 : vector<1x256xf32> -> vector<1x256xf32>
    %44 = vector.broadcast %43 : vector<1x256xf32> to vector<4x256xf32>
    %45 = arith.mulf %42, %44 : vector<4x256xf32>
    %46 = arith.addf %25, %45 : vector<4x256xf32>
    %c0_22 = arith.constant 0 : index
    %c0_23 = arith.constant 0 : index
    %47 = vector.load %arg5[%c0_22, %c0_23] : memref<4x1xf32, #tpu.memory_space<vmem>>, vector<4x1xf32>
    %48 = vector.broadcast %47 : vector<4x1xf32> to vector<4x256xf32>
    %49 = arith.addf %46, %48 : vector<4x256xf32>
    %c0_24 = arith.constant 0 : index
    %c0_25 = arith.constant 0 : index
    %50 = vector.load %arg6[%c0_24, %c0_25] : memref<4x256xf32, #tpu.memory_space<vmem>>, vector<4x256xf32>
    tpu.vector_store %arg6[%c0_24, %c0_25], %49 {strides = array<i32>} : memref<4x256xf32, #tpu.memory_space<vmem>>, vector<4x256xf32>,
    return
  }
  func.func @transform_0(%arg0: i32) -> (i32, i32) {
    %c0_i32 = arith.constant 0 : i32
    %c0_i32_0 = arith.constant 0 : i32
    return %c0_i32, %arg0 : i32, i32
  }
  func.func @transform_1(%arg0: i32) -> (i32, i32) {
    %c0_i32 = arith.constant 0 : i32
    %c0_i32_0 = arith.constant 0 : i32
    %c0_i32_1 = arith.constant 0 : i32
    return %c0_i32, %c0_i32_0 : i32, i32
  }
  func.func @transform_2(%arg0: i32) -> (i32, i32) {
    %c0_i32 = arith.constant 0 : i32
    %c0_i32_0 = arith.constant 0 : i32
    %c0_i32_1 = arith.constant 0 : i32
    return %c0_i32, %c0_i32_0 : i32, i32
  }
  func.func @transform_3(%arg0: i32) -> (i32, i32, i32) {
    %c0_i32 = arith.constant 0 : i32
    %c0_i32_0 = arith.constant 0 : i32
    %c0_i32_1 = arith.constant 0 : i32
    %c0_i32_2 = arith.constant 0 : i32
    return %c0_i32, %c0_i32_0, %c0_i32_1 : i32, i32, i32
  }
  func.func @transform_4(%arg0: i32) -> (i32, i32) {
    %c0_i32 = arith.constant 0 : i32
    %c0_i32_0 = arith.constant 0 : i32
    %c0_i32_1 = arith.constant 0 : i32
    return %c0_i32, %c0_i32_0 : i32, i32
  }
  func.func @transform_5(%arg0: i32) -> (i32, i32) {
    %c0_i32 = arith.constant 0 : i32
    %c0_i32_0 = arith.constant 0 : i32
    return %c0_i32, %arg0 : i32, i32
  }
}

</mosaic_0001>

<llo_original>
// kernel: tpu_custom_call.1
$region0: #{tpu_custom_call.1}
  #allocation0 [shape = 'u32[]', space=smem, size = 0x4, offset = 0x4, fixed_abs, tag = 'smem constant byte address 0x4 - core index']
  #allocation1 [shape = 'u32[144,128]{1,0:T(1,128)}', space=vmem, size = 0x12000, scoped, tag = 'internal scratch']
  %s0 = inlined_call_operand.vmem [shape: f32[4,512], index: 0, kind: input, shape index: {}]
  %s1 = inlined_call_operand.vmem [shape: f32[48,4], index: 1, kind: input, shape index: {}]
  %s2 = inlined_call_operand.vmem [shape: f32[48,1], index: 2, kind: input, shape index: {}]
  %s3 = inlined_call_operand.vmem [shape: f32[2,4,8], index: 3, kind: input, shape index: {}]
  %s4 = inlined_call_operand.vmem [shape: f32[4,1], index: 4, kind: input, shape index: {}]
  %s5 = inlined_call_operand.hbm [shape: f32[4,512], index: 5, kind: output, shape index: {}]
  %s6 = sld [smem:[#allocation0]]
  $region53: #{tpu_custom_call.1} parent=0
    _
  %s8 = ssub.s32 1, %s6
  %s9 = scalar_select 0, %s8, %s6
  $region1: #{tpu_custom_call.1} parent=0
    #allocation2 [shape = 'u8[8192]{0}', space=vmem, size = 0x2000, scoped, tag = 'output window, operand 0']
    #allocation3 [shape = 's32[2]{0}', space=sflag, size = 0x8, scoped, tag = 'scoped memory for tpu_custom_call.1']
    %10 = vsyncpa [#allocation3], 0
    %s11 = scalar_lea.sflag [#allocation3], 1
    %12 = vsyncpa %s11, 0
    loop: start=0, step=1, limit=4
    $region2: #{tpu_custom_call.1} parent=1 // loop_pre_header
      _
    $region3: #{tpu_custom_call.1} parent=1 // loop_header
      %s14 = sphi 0, %s18
      %p15 = scmp.ge.s32.totalorder %s14, 4
      %s24 = sphi 0, %s26
      %s27 = sphi 0, %s24
      %s28 = sphi 0, %s27
      %s44 = sphi 0, %s28
      %s48 = sphi 0, %s48
      %s50 = sphi 0, %s48
      %s51 = sphi 0, %s50
      %s65 = sphi 0, %s51
      %s69 = sphi 0, %s69
      %s71 = sphi 0, %s69
      %s72 = sphi 0, %s71
      %s86 = sphi 0, %s72
      %s90 = sphi 0, %s90
      %s92 = sphi 0, %s90
      %s93 = sphi 0, %s92
      %s107 = sphi 0, %s93
      %s111 = sphi 0, %s111
      %s113 = sphi 0, %s111
      %s114 = sphi 0, %s113
      %s128 = sphi 0, %s114
      %s134 = sphi 0, %s136
      %s137 = sphi 0, %s134
      %s138 = sphi 0, %s137
      %s154 = sphi 0, %s138
    $region4: #{tpu_custom_call.1} parent=1 // loop_header_branch
      %17 = sbr.rel (%p15) target = $region8
    $region5: #{tpu_custom_call.1} parent=1 // loop_body
      %s19 = ssub.s32 %s14, 1
      %s20 = ssub.s32 %s14, 2
      %s21 = sadd.s32 %s14, 1
      %s22 = ssub.s32 %s14, %s21
      %p23 = scmp.eq.s32.totalorder %s22, 0
      %s25 = sadd.s32 %s24, 1
      %s26 = scalar_select %p23, %s24, %s25
      %p29 = pneg %p23
      %p30 = scmp.eq.s32.totalorder %s14, 1
      %p31 = por %p29, %p30
      %p32 = scmp.ne.s32.totalorder %s24, %s27
      %p33 = scmp.eq.s32.totalorder %s14, 0
      %p34 = por %p32, %p33
      %p35 = scmp.ne.s32.totalorder %s24, %s27
      %p36 = scmp.eq.s32.totalorder %s19, 1
      %p37 = por %p35, %p36
      %p38 = scmp.ne.s32.totalorder %s27, %s28
      %p39 = scmp.eq.s32.totalorder %s19, 0
      %p40 = por %p38, %p39
      %p41 = scmp.ne.s32.totalorder %s27, %s28
      %p42 = scmp.eq.s32.totalorder %s20, 1
      %p43 = por %p41, %p42
      %p45 = scmp.ne.s32.totalorder %s28, %s44
      %p46 = scmp.eq.s32.totalorder %s20, 0
      %p47 = por %p45, %p46
      %s49 = sadd.s32 %s48, 1
      %p52 = scmp.eq.s32.totalorder %s14, 1
      %p53 = scmp.ne.s32.totalorder %s48, %s50
      %p54 = scmp.eq.s32.totalorder %s14, 0
      %p55 = por %p53, %p54
      %p56 = scmp.ne.s32.totalorder %s48, %s50
      %p57 = scmp.eq.s32.totalorder %s19, 1
      %p58 = por %p56, %p57
      %p59 = scmp.ne.s32.totalorder %s50, %s51
      %p60 = scmp.eq.s32.totalorder %s19, 0
      %p61 = por %p59, %p60
      %p62 = scmp.ne.s32.totalorder %s50, %s51
      %p63 = scmp.eq.s32.totalorder %s20, 1
      %p64 = por %p62, %p63
      %p66 = scmp.ne.s32.totalorder %s51, %s65
      %p67 = scmp.eq.s32.totalorder %s20, 0
      %p68 = por %p66, %p67
      %s70 = sadd.s32 %s69, 1
      %p73 = scmp.eq.s32.totalorder %s14, 1
      %p74 = scmp.ne.s32.totalorder %s69, %s71
      %p75 = scmp.eq.s32.totalorder %s14, 0
      %p76 = por %p74, %p75
      %p77 = scmp.ne.s32.totalorder %s69, %s71
      %p78 = scmp.eq.s32.totalorder %s19, 1
      %p79 = por %p77, %p78
      %p80 = scmp.ne.s32.totalorder %s71, %s72
      %p81 = scmp.eq.s32.totalorder %s19, 0
      %p82 = por %p80, %p81
      %p83 = scmp.ne.s32.totalorder %s71, %s72
      %p84 = scmp.eq.s32.totalorder %s20, 1
      %p85 = por %p83, %p84
      %p87 = scmp.ne.s32.totalorder %s72, %s86
      %p88 = scmp.eq.s32.totalorder %s20, 0
      %p89 = por %p87, %p88
      %s91 = sadd.s32 %s90, 1
      %p94 = scmp.eq.s32.totalorder %s14, 1
      %p95 = scmp.ne.s32.totalorder %s90, %s92
      %p96 = scmp.eq.s32.totalorder %s14, 0
      %p97 = por %p95, %p96
      %p98 = scmp.ne.s32.totalorder %s90, %s92
      %p99 = scmp.eq.s32.totalorder %s19, 1
      %p100 = por %p98, %p99
      %p101 = scmp.ne.s32.totalorder %s92, %s93
      %p102 = scmp.eq.s32.totalorder %s19, 0
      %p103 = por %p101, %p102
      %p104 = scmp.ne.s32.totalorder %s92, %s93
      %p105 = scmp.eq.s32.totalorder %s20, 1
      %p106 = por %p104, %p105
      %p108 = scmp.ne.s32.totalorder %s93, %s107
      %p109 = scmp.eq.s32.totalorder %s20, 0
      %p110 = por %p108, %p109
      %s112 = sadd.s32 %s111, 1
      %p115 = scmp.eq.s32.totalorder %s14, 1
      %p116 = scmp.ne.s32.totalorder %s111, %s113
      %p117 = scmp.eq.s32.totalorder %s14, 0
      %p118 = por %p116, %p117
      %p119 = scmp.ne.s32.totalorder %s111, %s113
      %p120 = scmp.eq.s32.totalorder %s19, 1
      %p121 = por %p119, %p120
      %p122 = scmp.ne.s32.totalorder %s113, %s114
      %p123 = scmp.eq.s32.totalorder %s19, 0
      %p124 = por %p122, %p123
      %p125 = scmp.ne.s32.totalorder %s113, %s114
      %p126 = scmp.eq.s32.totalorder %s20, 1
      %p127 = por %p125, %p126
      %p129 = scmp.ne.s32.totalorder %s114, %s128
      %p130 = scmp.eq.s32.totalorder %s20, 0
      %p131 = por %p129, %p130
      %s132 = ssub.s32 %s14, %s21
      %p133 = scmp.eq.s32.totalorder %s132, 0
      %s135 = sadd.s32 %s134, 1
      %s136 = scalar_select %p133, %s134, %s135
      %p139 = pneg %p133
      %p140 = scmp.eq.s32.totalorder %s14, 1
      %p141 = por %p139, %p140
      %p142 = scmp.ne.s32.totalorder %s134, %s137
      %p143 = scmp.eq.s32.totalorder %s14, 0
      %p144 = por %p142, %p143
      %p145 = scmp.ne.s32.totalorder %s134, %s137
      %p146 = scmp.eq.s32.totalorder %s19, 1
      %p147 = por %p145, %p146
      %p148 = scmp.ne.s32.totalorder %s137, %s138
      %p149 = scmp.eq.s32.totalorder %s19, 0
      %p150 = por %p148, %p149
      %p151 = scmp.ne.s32.totalorder %s137, %s138
      %p152 = scmp.eq.s32.totalorder %s20, 1
      %p153 = por %p151, %p152
      %p155 = scmp.ne.s32.totalorder %s138, %s154
      %p156 = scmp.eq.s32.totalorder %s20, 0
      %p157 = por %p155, %p156
      %p158 = scmp.le.s32.totalorder 1, %s14
      %p159 = scmp.lt.s32.totalorder %s14, 3
      %p160 = pnand %p158, %p159
      %p161 = pneg %p160
      // Predicated region
      $region9: #{tpu_custom_call.1} parent=5 // pred_check
        _
      $region10: #{tpu_custom_call.1} parent=5 // pred_check_branch
        %163 = sbr.rel (%p160) target = $region12
      $region11: #{tpu_custom_call.1} parent=5 // pred_region
        %s164 = ssub.s32 %s14, 1
        // Predicated region
        $region13: #{tpu_custom_call.1} parent=11 // pred_check
          %p165 = pneg %p61
        $region14: #{tpu_custom_call.1} parent=11 // pred_check_branch
          %167 = sbr.rel (%p165) target = $region16
        $region15: #{tpu_custom_call.1} parent=11 // pred_region
          _
        $region16: #{tpu_custom_call.1} parent=11 // pred_fallthru
          _
        // Predicated region
        $region17: #{tpu_custom_call.1} parent=11 // pred_check
          %p168 = pneg %p82
        $region18: #{tpu_custom_call.1} parent=11 // pred_check_branch
          %170 = sbr.rel (%p168) target = $region20
        $region19: #{tpu_custom_call.1} parent=11 // pred_region
          _
        $region20: #{tpu_custom_call.1} parent=11 // pred_fallthru
          _
        // Predicated region
        $region21: #{tpu_custom_call.1} parent=11 // pred_check
          %p171 = pneg %p103
        $region22: #{tpu_custom_call.1} parent=11 // pred_check_branch
          %173 = sbr.rel (%p171) target = $region24
        $region23: #{tpu_custom_call.1} parent=11 // pred_region
          _
        $region24: #{tpu_custom_call.1} parent=11 // pred_fallthru
          _
        // Predicated region
        $region25: #{tpu_custom_call.1} parent=11 // pred_check
          %p174 = pneg %p124
        $region26: #{tpu_custom_call.1} parent=11 // pred_check_branch
          %176 = sbr.rel (%p174) target = $region28
        $region27: #{tpu_custom_call.1} parent=11 // pred_region
          _
        $region28: #{tpu_custom_call.1} parent=11 // pred_fallthru
          _
      $region12: #{tpu_custom_call.1} parent=5 // pred_fallthru
        _
      %p177 = scmp.lt.s32.totalorder %s14, 2
      // Predicated region
      $region29: #{tpu_custom_call.1} parent=5 // pred_check
        %p178 = pneg %p177
      $region30: #{tpu_custom_call.1} parent=5 // pred_check_branch
        %180 = sbr.rel (%p178) target = $region32
      $region31: #{tpu_custom_call.1} parent=5 // pred_region
        // Predicated region
        $region33: #{tpu_custom_call.1} parent=31 // pred_check
          %p181 = pneg %p34
        $region34: #{tpu_custom_call.1} parent=31 // pred_check_branch
          %183 = sbr.rel (%p181) target = $region36
        $region35: #{tpu_custom_call.1} parent=31 // pred_region
          %s184 = smul.u32 2, %s14
          %p185 = scmp.lt.s32.totalorder %s184, 3
          %s186 = scalar_select %p185, %s184, 3
          %s187 = smul.addr %s186, 4
          %s188 = scalar_lea.vmem %s0, %s187
          %s189 = smul.u32 2, %s14
        $region36: #{tpu_custom_call.1} parent=31 // pred_fallthru
          _
      $region32: #{tpu_custom_call.1} parent=5 // pred_fallthru
        _
      %p190 = scmp.le.s32.totalorder 1, %s14
      %p191 = scmp.lt.s32.totalorder %s14, 3
      %p192 = pnand %p190, %p191
      %p193 = pneg %p192
      // Predicated region
      $region37: #{tpu_custom_call.1} parent=5 // pred_check
        _
      $region38: #{tpu_custom_call.1} parent=5 // pred_check_branch
        %195 = sbr.rel (%p192) target = $region40
      $region39: #{tpu_custom_call.1} parent=5 // pred_region
        %s196 = ssub.s32 %s14, 1
        %s197 = smul.u32 2, %s19
        %p198 = scmp.lt.s32.totalorder %s197, 3
        %s199 = scalar_select %p198, %s197, 3
        %s200 = smul.addr %s199, 4
        %s201 = scalar_lea.vmem %s0, %s200
        %p202 = pneg %p40
        %p203 = pneg %p37
        %p204 = pneg %p61
        %p205 = pneg %p58
        %p206 = pneg %p82
        %p207 = pneg %p79
        %p208 = pneg %p103
        %p209 = pneg %p100
        %p210 = pneg %p124
        %p211 = pneg %p121
        %p212 = pneg %p150
        %p213 = pneg %p147
        %s214 = sand.u32 %s137, 1
        %s215 = scalar_lea.sflag [#allocation3], %s214
        %s216 = sand.u32 %s137, 1
        %s217 = smul.addr %s216, 8
        %s218 = scalar_lea.vmem [#allocation2], %s217
        %s219 = smul.u32 2, %s19
        %p220 = scmp.lt.s32.totalorder %s219, 3
        %s221 = scalar_select %p220, %s219, 3
        %s222 = smul.addr %s221, 4
        %s223 = scalar_lea.vmem %s0, %s222
        %s224 = smul.u32 2, %s19
        %s225 = smul.u32 2, %s19
        %v226 = vld [vmem:[%s1] sm:$0xff]
        %v227 = vld [vmem:[%s1 + $0x8] sm:$0xff]
        %v228 = vld [vmem:[%s1 + $0x10] sm:$0xff]
        %v229 = vld [vmem:[%s1 + $0x18] sm:$0xff]
        %v230 = vld [vmem:[%s1 + $0x20] sm:$0xff]
        %v231 = vld [vmem:[%s1 + $0x28] sm:$0xff]
        %v232 = vld [vmem:[%s223] sm:$0xff]
        %v233 = vld [vmem:[%s2] sm:$0xff]
        %v234 = vld [vmem:[%s2 + $0x8] sm:$0xff]
        %v235 = vld [vmem:[%s2 + $0x10] sm:$0xff]
        %v236 = vld [vmem:[%s2 + $0x18] sm:$0xff]
        %v237 = vld [vmem:[%s2 + $0x20] sm:$0xff]
        %v238 = vld [vmem:[%s2 + $0x28] sm:$0xff]
        %240 = vset.pattern.permute.xlu0 0
        %241 = vperm.xlu0 %240, %v233
        %v242 = vpop.permute.xlu0 %241
        %245 = vset.pattern.permute.xlu0 0
        %246 = vperm.xlu0 %245, %v234
        %v247 = vpop.permute.xlu0 %246
        %250 = vset.pattern.permute.xlu0 0
        %251 = vperm.xlu0 %250, %v235
        %v252 = vpop.permute.xlu0 %251
        %255 = vset.pattern.permute.xlu0 0
        %256 = vperm.xlu0 %255, %v236
        %v257 = vpop.permute.xlu0 %256
        %260 = vset.pattern.permute.xlu0 0
        %261 = vperm.xlu0 %260, %v237
        %v262 = vpop.permute.xlu0 %261
        %265 = vset.pattern.permute.xlu0 0
        %266 = vperm.xlu0 %265, %v238
        %v267 = vpop.permute.xlu0 %266
        %v270 = vcombine.high %v232, %v232
        %vm271 = vcmask 31744
        %v273 = vsel %vm271, %v226, 0
        %v276 = vsel %vm271, %v227, 0
        %v279 = vsel %vm271, %v228, 0
        %v282 = vsel %vm271, %v229, 0
        %v285 = vsel %vm271, %v230, 0
        %v288 = vsel %vm271, %v231, 0
        %vm290 = vcmask 1043456
        %v291 = vsel %vm290, %v232, 0
        %v293 = vsel %vm290, %v270, 0
        %295 = vmatprep.subr.mxu0 %v293
        %296 = vmatpush1.msra.mxu0 %v291
        %297 = vmatprep.subr.mxu0 0.0
        %298 = vmatpush1.msra.mxu0 0.0
        %299 = vmatprep.subr.mxu0 0.0
        %300 = vmatpush1.msra.mxu0 0.0
        %301 = vmatprep.subr.mxu0 0.0
        %302 = vmatpush1.msra.mxu0 0.0
        %303 = vmatprep.subr.mxu0 0.0
        %304 = vmatpush1.msra.mxu0 0.0
        %305 = vmatprep.subr.mxu0 0.0
        %306 = vmatpush1.msra.mxu0 0.0
        %307 = vmatprep.subr.mxu0 0.0
        %308 = vmatpush1.msra.mxu0 0.0
        %309 = vmatprep.subr.mxu0 0.0
        %310 = vmatpush1.msra.mxu0 0.0
        %311 = vmatprep.subr.mxu0 0.0
        %312 = vmatpush1.msra.mxu0 0.0
        %313 = vmatprep.subr.mxu0 0.0
        %314 = vmatpush1.msra.mxu0 0.0
        %315 = vmatprep.subr.mxu0 0.0
        %316 = vmatpush1.msra.mxu0 0.0
        %317 = vmatprep.subr.mxu0 0.0
        %318 = vmatpush1.msra.mxu0 0.0
        %319 = vmatprep.subr.mxu0 0.0
        %320 = vmatpush1.msra.mxu0 0.0
        %321 = vmatprep.subr.mxu0 0.0
        %322 = vmatpush1.msra.mxu0 0.0
        %323 = vmatprep.subr.mxu0 0.0
        %324 = vmatpush1.msra.mxu0 0.0
        %325 = vmatprep.subr.mxu0 0.0
        %326 = vmatpush1.msra.mxu0 0.0
        %327 = vmatprep.subr.mxu0 0.0
        %328 = vmatpush1.msra.mxu0 0.0
        %329 = vmatprep.subr.mxu0 0.0
        %330 = vmatpush1.msra.mxu0 0.0
        %331 = vmatprep.subr.mxu0 0.0
        %332 = vmatpush1.msra.mxu0 0.0
        %333 = vmatprep.subr.mxu0 0.0
        %334 = vmatpush1.msra.mxu0 0.0
        %335 = vmatprep.subr.mxu0 0.0
        %336 = vmatpush1.msra.mxu0 0.0
        %337 = vmatprep.subr.mxu0 0.0
        %338 = vmatpush1.msra.mxu0 0.0
        %339 = vmatprep.subr.mxu0 0.0
        %340 = vmatpush1.msra.mxu0 0.0
        %341 = vmatprep.subr.mxu0 0.0
        %342 = vmatpush1.msra.mxu0 0.0
        %343 = vmatprep.subr.mxu0 0.0
        %344 = vmatpush1.msra.mxu0 0.0
        %345 = vmatprep.subr.mxu0 0.0
        %346 = vmatpush1.msra.mxu0 0.0
        %347 = vmatprep.subr.mxu0 0.0
        %348 = vmatpush1.msra.mxu0 0.0
        %349 = vmatprep.subr.mxu0 0.0
        %350 = vmatpush1.msra.mxu0 0.0
        %351 = vmatprep.subr.mxu0 0.0
        %352 = vmatpush1.msra.mxu0 0.0
        %353 = vmatprep.subr.mxu0 0.0
        %354 = vmatpush1.msra.mxu0 0.0
        %355 = vmatprep.subr.mxu0 0.0
        %356 = vmatpush1.msra.mxu0 0.0
        %357 = vmatprep.subr.mxu0 0.0
        %358 = vmatpush1.msra.mxu0 0.0
        %359 = vmatprep.mubr.f32.mxu0 0.0
        %360 = vmatmul.mubr.f32.gmra.mrb[0].mxu0 %v273
        %v361 = vpop.f32.mrb[0].mxu0
        %v362 = vadd.f32 %v242, %v361
        %v363 = vpop.f32.mrb[0].mxu0
        %v364 = vadd.f32 %v242, %v363
        %365 = vmatprep.mubr.f32.mxu0 0.0
        %366 = vmatmul.mubr.f32.gmra.mrb[0].mxu0 %v276
        %v367 = vpop.f32.mrb[0].mxu0
        %v368 = vadd.f32 %v247, %v367
        %v369 = vpop.f32.mrb[0].mxu0
        %v370 = vadd.f32 %v247, %v369
        %371 = vmatprep.mubr.f32.mxu0 0.0
        %372 = vmatmul.mubr.f32.gmra.mrb[0].mxu0 %v279
        %v373 = vpop.f32.mrb[0].mxu0
        %v374 = vadd.f32 %v252, %v373
        %v375 = vpop.f32.mrb[0].mxu0
        %v376 = vadd.f32 %v252, %v375
        %377 = vmatprep.mubr.f32.mxu0 0.0
        %378 = vmatmul.mubr.f32.gmra.mrb[0].mxu0 %v282
        %v379 = vpop.f32.mrb[0].mxu0
        %v380 = vadd.f32 %v257, %v379
        %v381 = vpop.f32.mrb[0].mxu0
        %v382 = vadd.f32 %v257, %v381
        %383 = vmatprep.mubr.f32.mxu0 0.0
        %384 = vmatmul.mubr.f32.gmra.mrb[0].mxu0 %v285
        %v385 = vpop.f32.mrb[0].mxu0
        %v386 = vadd.f32 %v262, %v385
        %v387 = vpop.f32.mrb[0].mxu0
        %v388 = vadd.f32 %v262, %v387
        %389 = vmatprep.mubr.f32.mxu0 0.0
        %390 = vmatmul.mubr.f32.gmra.mrb[0].mxu0 %v288
        %v391 = vpop.f32.mrb[0].mxu0
        %v392 = vadd.f32 %v267, %v391
        %v393 = vpop.f32.mrb[0].mxu0
        %v394 = vadd.f32 %v267, %v393
        %395 = vdwg.mxu0
        %v396 = vmul.f32 %v362, 0.35355338
        %v397 = vmul.f32 %v364, 0.35355338
        %398 = vxpose.xlu0.b32.start [1/16] %v374, 128
        %399 = vxpose.xlu0.b32.cont [2/16] 0.0, 128
        %400 = vxpose.xlu0.b32.cont [3/16] 0.0, 128
        %401 = vxpose.xlu0.b32.cont [4/16] 0.0, 128
        %402 = vxpose.xlu0.b32.cont [5/16] 0.0, 128
        %403 = vxpose.xlu0.b32.cont [6/16] 0.0, 128
        %404 = vxpose.xlu0.b32.cont [7/16] 0.0, 128
        %405 = vxpose.xlu0.b32.cont [8/16] 0.0, 128
        %406 = vxpose.xlu0.b32.cont [9/16] 0.0, 128
        %407 = vxpose.xlu0.b32.cont [10/16] 0.0, 128
        %408 = vxpose.xlu0.b32.cont [11/16] 0.0, 128
        %409 = vxpose.xlu0.b32.cont [12/16] 0.0, 128
        %410 = vxpose.xlu0.b32.cont [13/16] 0.0, 128
        %411 = vxpose.xlu0.b32.cont [14/16] 0.0, 128
        %412 = vxpose.xlu0.b32.cont [15/16] 0.0, 128
        %413 = vxpose.xlu0.b32.end [16/16] 0.0, 128
        %v414 = vpop.trf.xlu0
        %v415 = vpop.trf.xlu0
        %v416 = vpop.trf.xlu0
        %v417 = vpop.trf.xlu0
        %v418 = vpop.trf.xlu0
        %v419 = vpop.trf.xlu0
        %v420 = vpop.trf.xlu0
        %v421 = vpop.trf.xlu0
        %v422 = vpop.trf.xlu0
        %v423 = vpop.trf.xlu0
        %v424 = vpop.trf.xlu0
        %v425 = vpop.trf.xlu0
        %v426 = vpop.trf.xlu0
        %v427 = vpop.trf.xlu0
        %v428 = vpop.trf.xlu0
        %v429 = vpop.trf.xlu0
        %430 = vxpose.xlu0.b32.start [1/16] %v376, 128
        %431 = vxpose.xlu0.b32.cont [2/16] 0.0, 128
        %432 = vxpose.xlu0.b32.cont [3/16] 0.0, 128
        %433 = vxpose.xlu0.b32.cont [4/16] 0.0, 128
        %434 = vxpose.xlu0.b32.cont [5/16] 0.0, 128
        %435 = vxpose.xlu0.b32.cont [6/16] 0.0, 128
        %436 = vxpose.xlu0.b32.cont [7/16] 0.0, 128
        %437 = vxpose.xlu0.b32.cont [8/16] 0.0, 128
        %438 = vxpose.xlu0.b32.cont [9/16] 0.0, 128
        %439 = vxpose.xlu0.b32.cont [10/16] 0.0, 128
        %440 = vxpose.xlu0.b32.cont [11/16] 0.0, 128
        %441 = vxpose.xlu0.b32.cont [12/16] 0.0, 128
        %442 = vxpose.xlu0.b32.cont [13/16] 0.0, 128
        %443 = vxpose.xlu0.b32.cont [14/16] 0.0, 128
        %444 = vxpose.xlu0.b32.cont [15/16] 0.0, 128
        %445 = vxpose.xlu0.b32.end [16/16] 0.0, 128
        %v446 = vpop.trf.xlu0
        %v447 = vpop.trf.xlu0
        %v448 = vpop.trf.xlu0
        %v449 = vpop.trf.xlu0
        %v450 = vpop.trf.xlu0
        %v451 = vpop.trf.xlu0
        %v452 = vpop.trf.xlu0
        %v453 = vpop.trf.xlu0
        %v454 = vpop.trf.xlu0
        %v455 = vpop.trf.xlu0
        %v456 = vpop.trf.xlu0
        %v457 = vpop.trf.xlu0
        %v458 = vpop.trf.xlu0
        %v459 = vpop.trf.xlu0
        %v460 = vpop.trf.xlu0
        %v461 = vpop.trf.xlu0
        %vm462 = vcmask 64512
        %v464 = vsel %vm462, %v414, 0
        %v467 = vsel %vm462, %v415, 0
        %v470 = vsel %vm462, %v416, 0
        %v473 = vsel %vm462, %v417, 0
        %v476 = vsel %vm462, %v418, 0
        %v479 = vsel %vm462, %v419, 0
        %v482 = vsel %vm462, %v420, 0
        %v485 = vsel %vm462, %v421, 0
        %v488 = vsel %vm462, %v422, 0
        %v491 = vsel %vm462, %v423, 0
        %v494 = vsel %vm462, %v424, 0
        %v497 = vsel %vm462, %v425, 0
        %v500 = vsel %vm462, %v426, 0
        %v503 = vsel %vm462, %v427, 0
        %v506 = vsel %vm462, %v428, 0
        %v509 = vsel %vm462, %v429, 0
        %v512 = vsel %vm462, %v446, 0
        %v515 = vsel %vm462, %v447, 0
        %v518 = vsel %vm462, %v448, 0
        %v521 = vsel %vm462, %v449, 0
        %v524 = vsel %vm462, %v450, 0
        %v527 = vsel %vm462, %v451, 0
        %v530 = vsel %vm462, %v452, 0
        %v533 = vsel %vm462, %v453, 0
        %v536 = vsel %vm462, %v454, 0
        %v539 = vsel %vm462, %v455, 0
        %v542 = vsel %vm462, %v456, 0
        %v545 = vsel %vm462, %v457, 0
        %v548 = vsel %vm462, %v458, 0
        %v551 = vsel %vm462, %v459, 0
        %v554 = vsel %vm462, %v460, 0
        %v557 = vsel %vm462, %v461, 0
        %559 = vmatprep.subr.mxu0 %v397
        %560 = vmatpush1.msra.mxu0 %v396
        %561 = vmatprep.subr.mxu0 0.0
        %562 = vmatpush1.msra.mxu0 0.0
        %563 = vmatprep.subr.mxu0 0.0
        %564 = vmatpush1.msra.mxu0 0.0
        %565 = vmatprep.subr.mxu0 0.0
        %566 = vmatpush1.msra.mxu0 0.0
        %567 = vmatprep.subr.mxu0 0.0
        %568 = vmatpush1.msra.mxu0 0.0
        %569 = vmatprep.subr.mxu0 0.0
        %570 = vmatpush1.msra.mxu0 0.0
        %571 = vmatprep.subr.mxu0 0.0
        %572 = vmatpush1.msra.mxu0 0.0
        %573 = vmatprep.subr.mxu0 0.0
        %574 = vmatpush1.msra.mxu0 0.0
        %575 = vmatprep.subr.mxu0 0.0
        %576 = vmatpush1.msra.mxu0 0.0
        %577 = vmatprep.subr.mxu0 0.0
        %578 = vmatpush1.msra.mxu0 0.0
        %579 = vmatprep.subr.mxu0 0.0
        %580 = vmatpush1.msra.mxu0 0.0
        %581 = vmatprep.subr.mxu0 0.0
        %582 = vmatpush1.msra.mxu0 0.0
        %583 = vmatprep.subr.mxu0 0.0
        %584 = vmatpush1.msra.mxu0 0.0
        %585 = vmatprep.subr.mxu0 0.0
        %586 = vmatpush1.msra.mxu0 0.0
        %587 = vmatprep.subr.mxu0 0.0
        %588 = vmatpush1.msra.mxu0 0.0
        %589 = vmatprep.subr.mxu0 0.0
        %590 = vmatpush1.msra.mxu0 0.0
        %591 = vmatprep.subr.mxu0 0.0
        %592 = vmatpush1.msra.mxu0 0.0
        %593 = vmatprep.subr.mxu0 0.0
        %594 = vmatpush1.msra.mxu0 0.0
        %595 = vmatprep.subr.mxu0 0.0
        %596 = vmatpush1.msra.mxu0 0.0
        %597 = vmatprep.subr.mxu0 0.0
        %598 = vmatpush1.msra.mxu0 0.0
        %599 = vmatprep.subr.mxu0 0.0
        %600 = vmatpush1.msra.mxu0 0.0
        %601 = vmatprep.subr.mxu0 0.0
        %602 = vmatpush1.msra.mxu0 0.0
        %603 = vmatprep.subr.mxu0 0.0
        %604 = vmatpush1.msra.mxu0 0.0
        %605 = vmatprep.subr.mxu0 0.0
        %606 = vmatpush1.msra.mxu0 0.0
        %607 = vmatprep.subr.mxu0 0.0
        %608 = vmatpush1.msra.mxu0 0.0
        %609 = vmatprep.subr.mxu0 0.0
        %610 = vmatpush1.msra.mxu0 0.0
        %611 = vmatprep.subr.mxu0 0.0
        %612 = vmatpush1.msra.mxu0 0.0
        %613 = vmatprep.subr.mxu0 0.0
        %614 = vmatpush1.msra.mxu0 0.0
        %615 = vmatprep.subr.mxu0 0.0
        %616 = vmatpush1.msra.mxu0 0.0
        %617 = vmatprep.subr.mxu0 0.0
        %618 = vmatpush1.msra.mxu0 0.0
        %619 = vmatprep.subr.mxu0 0.0
        %620 = vmatpush1.msra.mxu0 0.0
        %621 = vmatprep.subr.mxu0 0.0
        %622 = vmatpush1.msra.mxu0 0.0
        %623 = vmatprep.mubr.f32.mxu0 0.0
        %624 = vmatmul.mubr.f32.gmra.mrb[0].mxu0 %v464
        %v625 = vpop.f32.mrb[0].mxu0
        %v626 = vadd.f32 0.0, %v625
        %v627 = vpop.f32.mrb[0].mxu0
        %v628 = vadd.f32 0.0, %v627
        %629 = vmatprep.mubr.f32.mxu0 0.0
        %630 = vmatmul.mubr.f32.gmra.mrb[0].mxu0 %v467
        %v631 = vpop.f32.mrb[0].mxu0
        %v632 = vadd.f32 0.0, %v631
        %v633 = vpop.f32.mrb[0].mxu0
        %v634 = vadd.f32 0.0, %v633
        %635 = vmatprep.mubr.f32.mxu0 0.0
        %636 = vmatmul.mubr.f32.gmra.mrb[0].mxu0 %v470
        %v637 = vpop.f32.mrb[0].mxu0
        %v638 = vadd.f32 0.0, %v637
        %v639 = vpop.f32.mrb[0].mxu0
        %v640 = vadd.f32 0.0, %v639
        %641 = vmatprep.mubr.f32.mxu0 0.0
        %642 = vmatmul.mubr.f32.gmra.mrb[0].mxu0 %v473
        %v643 = vpop.f32.mrb[0].mxu0
        %v644 = vadd.f32 0.0, %v643
        %v645 = vpop.f32.mrb[0].mxu0
        %v646 = vadd.f32 0.0, %v645
        %647 = vmatprep.mubr.f32.mxu0 0.0
        %648 = vmatmul.mubr.f32.gmra.mrb[0].mxu0 %v476
        %v649 = vpop.f32.mrb[0].mxu0
        %v650 = vadd.f32 0.0, %v649
        %v651 = vpop.f32.mrb[0].mxu0
        %v652 = vadd.f32 0.0, %v651
        %653 = vmatprep.mubr.f32.mxu0 0.0
        %654 = vmatmul.mubr.f32.gmra.mrb[0].mxu0 %v479
        %v655 = vpop.f32.mrb[0].mxu0
        %v656 = vadd.f32 0.0, %v655
        %v657 = vpop.f32.mrb[0].mxu0
        %v658 = vadd.f32 0.0, %v657
        %659 = vmatprep.mubr.f32.mxu0 0.0
        %660 = vmatmul.mubr.f32.gmra.mrb[0].mxu0 %v482
        %v661 = vpop.f32.mrb[0].mxu0
        %v662 = vadd.f32 0.0, %v661
        %v663 = vpop.f32.mrb[0].mxu0
        %v664 = vadd.f32 0.0, %v663
        %665 = vmatprep.mubr.f32.mxu0 0.0
        %666 = vmatmul.mubr.f32.gmra.mrb[0].mxu0 %v485
        %v667 = vpop.f32.mrb[0].mxu0
        %v668 = vadd.f32 0.0, %v667
        %v669 = vpop.f32.mrb[0].mxu0
        %v670 = vadd.f32 0.0, %v669
        %671 = vmatprep.mubr.f32.mxu0 0.0
        %672 = vmatmul.mubr.f32.gmra.mrb[0].mxu0 %v488
        %v673 = vpop.f32.mrb[0].mxu0
        %v674 = vadd.f32 0.0, %v673
        %v675 = vpop.f32.mrb[0].mxu0
        %v676 = vadd.f32 0.0, %v675
        %677 = vmatprep.mubr.f32.mxu0 0.0
        %678 = vmatmul.mubr.f32.gmra.mrb[0].mxu0 %v491
        %v679 = vpop.f32.mrb[0].mxu0
        %v680 = vadd.f32 0.0, %v679
        %v681 = vpop.f32.mrb[0].mxu0
        %v682 = vadd.f32 0.0, %v681
        %683 = vmatprep.mubr.f32.mxu0 0.0
        %684 = vmatmul.mubr.f32.gmra.mrb[0].mxu0 %v494
        %v685 = vpop.f32.mrb[0].mxu0
        %v686 = vadd.f32 0.0, %v685
        %v687 = vpop.f32.mrb[0].mxu0
        %v688 = vadd.f32 0.0, %v687
        %689 = vmatprep.mubr.f32.mxu0 0.0
        %690 = vmatmul.mubr.f32.gmra.mrb[0].mxu0 %v497
        %v691 = vpop.f32.mrb[0].mxu0
        %v692 = vadd.f32 0.0, %v691
        %v693 = vpop.f32.mrb[0].mxu0
        %v694 = vadd.f32 0.0, %v693
        %695 = vmatprep.mubr.f32.mxu0 0.0
        %696 = vmatmul.mubr.f32.gmra.mrb[0].mxu0 %v500
        %v697 = vpop.f32.mrb[0].mxu0
        %v698 = vadd.f32 0.0, %v697
        %v699 = vpop.f32.mrb[0].mxu0
        %v700 = vadd.f32 0.0, %v699
        %701 = vmatprep.mubr.f32.mxu0 0.0
        %702 = vmatmul.mubr.f32.gmra.mrb[0].mxu0 %v503
        %v703 = vpop.f32.mrb[0].mxu0
        %v704 = vadd.f32 0.0, %v703
        %v705 = vpop.f32.mrb[0].mxu0
        %v706 = vadd.f32 0.0, %v705
        %707 = vmatprep.mubr.f32.mxu0 0.0
        %708 = vmatmul.mubr.f32.gmra.mrb[0].mxu0 %v506
        %v709 = vpop.f32.mrb[0].mxu0
        %v710 = vadd.f32 0.0, %v709
        %v711 = vpop.f32.mrb[0].mxu0
        %v712 = vadd.f32 0.0, %v711
        %713 = vmatprep.mubr.f32.mxu0 0.0
        %714 = vmatmul.mubr.f32.gmra.mrb[0].mxu0 %v509
        %v715 = vpop.f32.mrb[0].mxu0
        %v716 = vadd.f32 0.0, %v715
        %v717 = vpop.f32.mrb[0].mxu0
        %v718 = vadd.f32 0.0, %v717
        %719 = vmatprep.mubr.f32.mxu0 0.0
        %720 = vmatmul.mubr.f32.gmra.mrb[0].mxu0 %v512
        %v721 = vpop.f32.mrb[0].mxu0
        %v722 = vadd.f32 0.0, %v721
        %v723 = vpop.f32.mrb[0].mxu0
        %v724 = vadd.f32 0.0, %v723
        %725 = vmatprep.mubr.f32.mxu0 0.0
        %726 = vmatmul.mubr.f32.gmra.mrb[0].mxu0 %v515
        %v727 = vpop.f32.mrb[0].mxu0
        %v728 = vadd.f32 0.0, %v727
        %v729 = vpop.f32.mrb[0].mxu0
        %v730 = vadd.f32 0.0, %v729
        %731 = vmatprep.mubr.f32.mxu0 0.0
        %732 = vmatmul.mubr.f32.gmra.mrb[0].mxu0 %v518
        %v733 = vpop.f32.mrb[0].mxu0
        %v734 = vadd.f32 0.0, %v733
        %v735 = vpop.f32.mrb[0].mxu0
        %v736 = vadd.f32 0.0, %v735
        %737 = vmatprep.mubr.f32.mxu0 0.0
        %738 = vmatmul.mubr.f32.gmra.mrb[0].mxu0 %v521
        %v739 = vpop.f32.mrb[0].mxu0
        %v740 = vadd.f32 0.0, %v739
        %v741 = vpop.f32.mrb[0].mxu0
        %v742 = vadd.f32 0.0, %v741
        %743 = vmatprep.mubr.f32.mxu0 0.0
        %744 = vmatmul.mubr.f32.gmra.mrb[0].mxu0 %v524
        %v745 = vpop.f32.mrb[0].mxu0
        %v746 = vadd.f32 0.0, %v745
        %v747 = vpop.f32.mrb[0].mxu0
        %v748 = vadd.f32 0.0, %v747
        %749 = vmatprep.mubr.f32.mxu0 0.0
        %750 = vmatmul.mubr.f32.gmra.mrb[0].mxu0 %v527
        %v751 = vpop.f32.mrb[0].mxu0
        %v752 = vadd.f32 0.0, %v751
        %v753 = vpop.f32.mrb[0].mxu0
        %v754 = vadd.f32 0.0, %v753
        %755 = vmatprep.mubr.f32.mxu0 0.0
        %756 = vmatmul.mubr.f32.gmra.mrb[0].mxu0 %v530
        %v757 = vpop.f32.mrb[0].mxu0
        %v758 = vadd.f32 0.0, %v757
        %v759 = vpop.f32.mrb[0].mxu0
        %v760 = vadd.f32 0.0, %v759
        %761 = vmatprep.mubr.f32.mxu0 0.0
        %762 = vmatmul.mubr.f32.gmra.mrb[0].mxu0 %v533
        %v763 = vpop.f32.mrb[0].mxu0
        %v764 = vadd.f32 0.0, %v763
        %v765 = vpop.f32.mrb[0].mxu0
        %v766 = vadd.f32 0.0, %v765
        %767 = vmatprep.mubr.f32.mxu0 0.0
        %768 = vmatmul.mubr.f32.gmra.mrb[0].mxu0 %v536
        %v769 = vpop.f32.mrb[0].mxu0
        %v770 = vadd.f32 0.0, %v769
        %v771 = vpop.f32.mrb[0].mxu0
        %v772 = vadd.f32 0.0, %v771
        %773 = vmatprep.mubr.f32.mxu0 0.0
        %774 = vmatmul.mubr.f32.gmra.mrb[0].mxu0 %v539
        %v775 = vpop.f32.mrb[0].mxu0
        %v776 = vadd.f32 0.0, %v775
        %v777 = vpop.f32.mrb[0].mxu0
        %v778 = vadd.f32 0.0, %v777
        %779 = vmatprep.mubr.f32.mxu0 0.0
        %780 = vmatmul.mubr.f32.gmra.mrb[0].mxu0 %v542
        %v781 = vpop.f32.mrb[0].mxu0
        %v782 = vadd.f32 0.0, %v781
        %v783 = vpop.f32.mrb[0].mxu0
        %v784 = vadd.f32 0.0, %v783
        %785 = vmatprep.mubr.f32.mxu0 0.0
        %786 = vmatmul.mubr.f32.gmra.mrb[0].mxu0 %v545
        %v787 = vpop.f32.mrb[0].mxu0
        %v788 = vadd.f32 0.0, %v787
        %v789 = vpop.f32.mrb[0].mxu0
        %v790 = vadd.f32 0.0, %v789
        %791 = vmatprep.mubr.f32.mxu0 0.0
        %792 = vmatmul.mubr.f32.gmra.mrb[0].mxu0 %v548
        %v793 = vpop.f32.mrb[0].mxu0
        %v794 = vadd.f32 0.0, %v793
        %v795 = vpop.f32.mrb[0].mxu0
        %v796 = vadd.f32 0.0, %v795
        %797 = vmatprep.mubr.f32.mxu0 0.0
        %798 = vmatmul.mubr.f32.gmra.mrb[0].mxu0 %v551
        %v799 = vpop.f32.mrb[0].mxu0
        %v800 = vadd.f32 0.0, %v799
        %v801 = vpop.f32.mrb[0].mxu0
        %v802 = vadd.f32 0.0, %v801
        %803 = vmatprep.mubr.f32.mxu0 0.0
        %804 = vmatmul.mubr.f32.gmra.mrb[0].mxu0 %v554
        %v805 = vpop.f32.mrb[0].mxu0
        %v806 = vadd.f32 0.0, %v805
        %v807 = vpop.f32.mrb[0].mxu0
        %v808 = vadd.f32 0.0, %v807
        %809 = vmatprep.mubr.f32.mxu0 0.0
        %810 = vmatmul.mubr.f32.gmra.mrb[0].mxu0 %v557
        %v811 = vpop.f32.mrb[0].mxu0
        %v812 = vadd.f32 0.0, %v811
        %v813 = vpop.f32.mrb[0].mxu0
        %v814 = vadd.f32 0.0, %v813
        %815 = vdwg.mxu0
        %v816 = vmax.f32 %v626, %v638
        %v817 = vmax.f32 %v632, %v644
        %v818 = vmax.f32 %v816, %v650
        %v819 = vmax.f32 %v817, %v656
        %v820 = vmax.f32 %v818, %v662
        %v821 = vmax.f32 %v819, %v668
        %v822 = vmax.f32 %v820, %v674
        %v823 = vmax.f32 %v821, %v680
        %v824 = vmax.f32 %v822, %v686
        %v825 = vmax.f32 %v823, %v692
        %v826 = vmax.f32 %v824, %v698
        %v827 = vmax.f32 %v825, %v704
        %v828 = vmax.f32 %v826, %v710
        %v829 = vmax.f32 %v827, %v716
        %v830 = vmax.f32 %v828, %v722
        %v831 = vmax.f32 %v829, %v728
        %v832 = vmax.f32 %v830, %v734
        %v833 = vmax.f32 %v831, %v740
        %v834 = vmax.f32 %v832, %v746
        %v835 = vmax.f32 %v833, %v752
        %v836 = vmax.f32 %v834, %v758
        %v837 = vmax.f32 %v835, %v764
        %v838 = vmax.f32 %v836, %v770
        %v839 = vmax.f32 %v837, %v776
        %v840 = vmax.f32 %v838, %v782
        %v841 = vmax.f32 %v839, %v788
        %v842 = vmax.f32 %v840, %v794
        %v843 = vmax.f32 %v841, %v800
        %v844 = vmax.f32 %v842, %v806
        %v845 = vmax.f32 %v843, %v812
        %v846 = vmax.f32 %v844, %v845
        %v847 = vrot.slane %v846, 4
        %v848 = vmax.f32 %v846, %v847
        %v849 = vrot.slane %v848, 2
        %v850 = vmax.f32 %v848, %v849
        %v851 = vrot.slane %v850, 1
        %v852 = vmax.f32 %v850, %v851
        %v853 = vmax.f32 %v628, %v640
        %v854 = vmax.f32 %v634, %v646
        %v855 = vmax.f32 %v853, %v652
        %v856 = vmax.f32 %v854, %v658
        %v857 = vmax.f32 %v855, %v664
        %v858 = vmax.f32 %v856, %v670
        %v859 = vmax.f32 %v857, %v676
        %v860 = vmax.f32 %v858, %v682
        %v861 = vmax.f32 %v859, %v688
        %v862 = vmax.f32 %v860, %v694
        %v863 = vmax.f32 %v861, %v700
        %v864 = vmax.f32 %v862, %v706
        %v865 = vmax.f32 %v863, %v712
        %v866 = vmax.f32 %v864, %v718
        %v867 = vmax.f32 %v865, %v724
        %v868 = vmax.f32 %v866, %v730
        %v869 = vmax.f32 %v867, %v736
        %v870 = vmax.f32 %v868, %v742
        %v871 = vmax.f32 %v869, %v748
        %v872 = vmax.f32 %v870, %v754
        %v873 = vmax.f32 %v871, %v760
        %v874 = vmax.f32 %v872, %v766
        %v875 = vmax.f32 %v873, %v772
        %v876 = vmax.f32 %v874, %v778
        %v877 = vmax.f32 %v875, %v784
        %v878 = vmax.f32 %v876, %v790
        %v879 = vmax.f32 %v877, %v796
        %v880 = vmax.f32 %v878, %v802
        %v881 = vmax.f32 %v879, %v808
        %v882 = vmax.f32 %v880, %v814
        %v883 = vmax.f32 %v881, %v882
        %v884 = vrot.slane %v883, 4
        %v885 = vmax.f32 %v883, %v884
        %v886 = vrot.slane %v885, 2
        %v887 = vmax.f32 %v885, %v886
        %v888 = vrot.slane %v887, 1
        %v889 = vmax.f32 %v887, %v888
        %v890 = vsub.f32 %v626, %v852
        %v891 = vsub.f32 %v628, %v889
        %v892 = vsub.f32 %v632, %v852
        %v893 = vsub.f32 %v634, %v889
        %v894 = vsub.f32 %v638, %v852
        %v895 = vsub.f32 %v640, %v889
        %v896 = vsub.f32 %v644, %v852
        %v897 = vsub.f32 %v646, %v889
        %v898 = vsub.f32 %v650, %v852
        %v899 = vsub.f32 %v652, %v889
        %v900 = vsub.f32 %v656, %v852
        %v901 = vsub.f32 %v658, %v889
        %v902 = vsub.f32 %v662, %v852
        %v903 = vsub.f32 %v664, %v889
        %v904 = vsub.f32 %v668, %v852
        %v905 = vsub.f32 %v670, %v889
        %v906 = vsub.f32 %v674, %v852
        %v907 = vsub.f32 %v676, %v889
        %v908 = vsub.f32 %v680, %v852
        %v909 = vsub.f32 %v682, %v889
        %v910 = vsub.f32 %v686, %v852
        %v911 = vsub.f32 %v688, %v889
        %v912 = vsub.f32 %v692, %v852
        %v913 = vsub.f32 %v694, %v889
        %v914 = vsub.f32 %v698, %v852
        %v915 = vsub.f32 %v700, %v889
        %v916 = vsub.f32 %v704, %v852
        %v917 = vsub.f32 %v706, %v889
        %v918 = vsub.f32 %v710, %v852
        %v919 = vsub.f32 %v712, %v889
        %v920 = vsub.f32 %v716, %v852
        %v921 = vsub.f32 %v718, %v889
        %v922 = vsub.f32 %v722, %v852
        %v923 = vsub.f32 %v724, %v889
        %v924 = vsub.f32 %v728, %v852
        %v925 = vsub.f32 %v730, %v889
        %v926 = vsub.f32 %v734, %v852
        %v927 = vsub.f32 %v736, %v889
        %v928 = vsub.f32 %v740, %v852
        %v929 = vsub.f32 %v742, %v889
        %v930 = vsub.f32 %v746, %v852
        %v931 = vsub.f32 %v748, %v889
        %v932 = vsub.f32 %v752, %v852
        %v933 = vsub.f32 %v754, %v889
        %v934 = vsub.f32 %v758, %v852
        %v935 = vsub.f32 %v760, %v889
        %v936 = vsub.f32 %v764, %v852
        %v937 = vsub.f32 %v766, %v889
        %v938 = vsub.f32 %v770, %v852
        %v939 = vsub.f32 %v772, %v889
        %v940 = vsub.f32 %v776, %v852
        %v941 = vsub.f32 %v778, %v889
        %v942 = vsub.f32 %v782, %v852
        %v943 = vsub.f32 %v784, %v889
        %v944 = vsub.f32 %v788, %v852
        %v945 = vsub.f32 %v790, %v889
        %v946 = vsub.f32 %v794, %v852
        %v947 = vsub.f32 %v796, %v889
        %v948 = vsub.f32 %v800, %v852
        %v949 = vsub.f32 %v802, %v889
        %v950 = vsub.f32 %v806, %v852
        %v951 = vsub.f32 %v808, %v889
        %v952 = vsub.f32 %v812, %v852
        %v953 = vsub.f32 %v814, %v889
        %v954 = vmul.f32 %v890, 1.442695
        %v955 = vpow.pop %v954
        %v956 = vmul.f32 %v891, 1.442695
        %v957 = vpow.pop %v956
        %v958 = vmul.f32 %v892, 1.442695
        %v959 = vpow.pop %v958
        %v960 = vmul.f32 %v893, 1.442695
        %v961 = vpow.pop %v960
        %v962 = vmul.f32 %v894, 1.442695
        %v963 = vpow.pop %v962
        %v964 = vmul.f32 %v895, 1.442695
        %v965 = vpow.pop %v964
        %v966 = vmul.f32 %v896, 1.442695
        %v967 = vpow.pop %v966
        %v968 = vmul.f32 %v897, 1.442695
        %v969 = vpow.pop %v968
        %v970 = vmul.f32 %v898, 1.442695
        %v971 = vpow.pop %v970
        %v972 = vmul.f32 %v899, 1.442695
        %v973 = vpow.pop %v972
        %v974 = vmul.f32 %v900, 1.442695
        %v975 = vpow.pop %v974
        %v976 = vmul.f32 %v901, 1.442695
        %v977 = vpow.pop %v976
        %v978 = vmul.f32 %v902, 1.442695
        %v979 = vpow.pop %v978
        %v980 = vmul.f32 %v903, 1.442695
        %v981 = vpow.pop %v980
        %v982 = vmul.f32 %v904, 1.442695
        %v983 = vpow.pop %v982
        %v984 = vmul.f32 %v905, 1.442695
        %v985 = vpow.pop %v984
        %v986 = vmul.f32 %v906, 1.442695
        %v987 = vpow.pop %v986
        %v988 = vmul.f32 %v907, 1.442695
        %v989 = vpow.pop %v988
        %v990 = vmul.f32 %v908, 1.442695
        %v991 = vpow.pop %v990
        %v992 = vmul.f32 %v909, 1.442695
        %v993 = vpow.pop %v992
        %v994 = vmul.f32 %v910, 1.442695
        %v995 = vpow.pop %v994
        %v996 = vmul.f32 %v911, 1.442695
        %v997 = vpow.pop %v996
        %v998 = vmul.f32 %v912, 1.442695
        %v999 = vpow.pop %v998
        %v1000 = vmul.f32 %v913, 1.442695
        %v1001 = vpow.pop %v1000
        %v1002 = vmul.f32 %v914, 1.442695
        %v1003 = vpow.pop %v1002
        %v1004 = vmul.f32 %v915, 1.442695
        %v1005 = vpow.pop %v1004
        %v1006 = vmul.f32 %v916, 1.442695
        %v1007 = vpow.pop %v1006
        %v1008 = vmul.f32 %v917, 1.442695
        %v1009 = vpow.pop %v1008
        %v1010 = vmul.f32 %v918, 1.442695
        %v1011 = vpow.pop %v1010
        %v1012 = vmul.f32 %v919, 1.442695
        %v1013 = vpow.pop %v1012
        %v1014 = vmul.f32 %v920, 1.442695
        %v1015 = vpow.pop %v1014
        %v1016 = vmul.f32 %v921, 1.442695
        %v1017 = vpow.pop %v1016
        %v1018 = vmul.f32 %v922, 1.442695
        %v1019 = vpow.pop %v1018
        %v1020 = vmul.f32 %v923, 1.442695
        %v1021 = vpow.pop %v1020
        %v1022 = vmul.f32 %v924, 1.442695
        %v1023 = vpow.pop %v1022
        %v1024 = vmul.f32 %v925, 1.442695
        %v1025 = vpow.pop %v1024
        %v1026 = vmul.f32 %v926, 1.442695
        %v1027 = vpow.pop %v1026
        %v1028 = vmul.f32 %v927, 1.442695
        %v1029 = vpow.pop %v1028
        %v1030 = vmul.f32 %v928, 1.442695
        %v1031 = vpow.pop %v1030
        %v1032 = vmul.f32 %v929, 1.442695
        %v1033 = vpow.pop %v1032
        %v1034 = vmul.f32 %v930, 1.442695
        %v1035 = vpow.pop %v1034
        %v1036 = vmul.f32 %v931, 1.442695
        %v1037 = vpow.pop %v1036
        %v1038 = vmul.f32 %v932, 1.442695
        %v1039 = vpow.pop %v1038
        %v1040 = vmul.f32 %v933, 1.442695
        %v1041 = vpow.pop %v1040
        %v1042 = vmul.f32 %v934, 1.442695
        %v1043 = vpow.pop %v1042
        %v1044 = vmul.f32 %v935, 1.442695
        %v1045 = vpow.pop %v1044
        %v1046 = vmul.f32 %v936, 1.442695
        %v1047 = vpow.pop %v1046
        %v1048 = vmul.f32 %v937, 1.442695
        %v1049 = vpow.pop %v1048
        %v1050 = vmul.f32 %v938, 1.442695
        %v1051 = vpow.pop %v1050
        %v1052 = vmul.f32 %v939, 1.442695
        %v1053 = vpow.pop %v1052
        %v1054 = vmul.f32 %v940, 1.442695
        %v1055 = vpow.pop %v1054
        %v1056 = vmul.f32 %v941, 1.442695
        %v1057 = vpow.pop %v1056
        %v1058 = vmul.f32 %v942, 1.442695
        %v1059 = vpow.pop %v1058
        %v1060 = vmul.f32 %v943, 1.442695
        %v1061 = vpow.pop %v1060
        %v1062 = vmul.f32 %v944, 1.442695
        %v1063 = vpow.pop %v1062
        %v1064 = vmul.f32 %v945, 1.442695
        %v1065 = vpow.pop %v1064
        %v1066 = vmul.f32 %v946, 1.442695
        %v1067 = vpow.pop %v1066
        %v1068 = vmul.f32 %v947, 1.442695
        %v1069 = vpow.pop %v1068
        %v1070 = vmul.f32 %v948, 1.442695
        %v1071 = vpow.pop %v1070
        %v1072 = vmul.f32 %v949, 1.442695
        %v1073 = vpow.pop %v1072
        %v1074 = vmul.f32 %v950, 1.442695
        %v1075 = vpow.pop %v1074
        %v1076 = vmul.f32 %v951, 1.442695
        %v1077 = vpow.pop %v1076
        %v1078 = vmul.f32 %v952, 1.442695
        %v1079 = vpow.pop %v1078
        %v1080 = vmul.f32 %v953, 1.442695
        %v1081 = vpow.pop %v1080
        %v1082 = vadd.f32 %v955, %v959
        %v1083 = vadd.f32 %v1082, %v963
        %v1084 = vadd.f32 %v1083, %v967
        %v1085 = vadd.f32 %v1084, %v971
        %v1086 = vadd.f32 %v1085, %v975
        %v1087 = vadd.f32 %v1086, %v979
        %v1088 = vadd.f32 %v1087, %v983
        %v1089 = vadd.f32 %v1088, %v987
        %v1090 = vadd.f32 %v1089, %v991
        %v1091 = vadd.f32 %v1090, %v995
        %v1092 = vadd.f32 %v1091, %v999
        %v1093 = vadd.f32 %v1092, %v1003
        %v1094 = vadd.f32 %v1093, %v1007
        %v1095 = vadd.f32 %v1094, %v1011
        %v1096 = vadd.f32 %v1095, %v1015
        %v1097 = vadd.f32 %v1096, %v1019
        %v1098 = vadd.f32 %v1097, %v1023
        %v1099 = vadd.f32 %v1098, %v1027
        %v1100 = vadd.f32 %v1099, %v1031
        %v1101 = vadd.f32 %v1100, %v1035
        %v1102 = vadd.f32 %v1101, %v1039
        %v1103 = vadd.f32 %v1102, %v1043
        %v1104 = vadd.f32 %v1103, %v1047
        %v1105 = vadd.f32 %v1104, %v1051
        %v1106 = vadd.f32 %v1105, %v1055
        %v1107 = vadd.f32 %v1106, %v1059
        %v1108 = vadd.f32 %v1107, %v1063
        %v1109 = vadd.f32 %v1108, %v1067
        %v1110 = vadd.f32 %v1109, %v1071
        %v1111 = vadd.f32 %v1110, %v1075
        %v1112 = vadd.f32 %v1111, %v1079
        %v1113 = vrot.slane %v1112, 4
        %v1114 = vadd.f32 %v1112, %v1113
        %v1115 = vrot.slane %v1114, 2
        %v1116 = vadd.f32 %v1114, %v1115
        %v1117 = vrot.slane %v1116, 1
        %v1118 = vadd.f32 %v1116, %v1117
        %v1119 = vadd.f32 %v957, %v961
        %v1120 = vadd.f32 %v1119, %v965
        %v1121 = vadd.f32 %v1120, %v969
        %v1122 = vadd.f32 %v1121, %v973
        %v1123 = vadd.f32 %v1122, %v977
        %v1124 = vadd.f32 %v1123, %v981
        %v1125 = vadd.f32 %v1124, %v985
        %v1126 = vadd.f32 %v1125, %v989
        %v1127 = vadd.f32 %v1126, %v993
        %v1128 = vadd.f32 %v1127, %v997
        %v1129 = vadd.f32 %v1128, %v1001
        %v1130 = vadd.f32 %v1129, %v1005
        %v1131 = vadd.f32 %v1130, %v1009
        %v1132 = vadd.f32 %v1131, %v1013
        %v1133 = vadd.f32 %v1132, %v1017
        %v1134 = vadd.f32 %v1133, %v1021
        %v1135 = vadd.f32 %v1134, %v1025
        %v1136 = vadd.f32 %v1135, %v1029
        %v1137 = vadd.f32 %v1136, %v1033
        %v1138 = vadd.f32 %v1137, %v1037
        %v1139 = vadd.f32 %v1138, %v1041
        %v1140 = vadd.f32 %v1139, %v1045
        %v1141 = vadd.f32 %v1140, %v1049
        %v1142 = vadd.f32 %v1141, %v1053
        %v1143 = vadd.f32 %v1142, %v1057
        %v1144 = vadd.f32 %v1143, %v1061
        %v1145 = vadd.f32 %v1144, %v1065
        %v1146 = vadd.f32 %v1145, %v1069
        %v1147 = vadd.f32 %v1146, %v1073
        %v1148 = vadd.f32 %v1147, %v1077
        %v1149 = vadd.f32 %v1148, %v1081
        %v1150 = vrot.slane %v1149, 4
        %v1151 = vadd.f32 %v1149, %v1150
        %v1152 = vrot.slane %v1151, 2
        %v1153 = vadd.f32 %v1151, %v1152
        %v1154 = vrot.slane %v1153, 1
        %v1155 = vadd.f32 %v1153, %v1154
        %1156 = vmatprep.subr.mxu0 %v957
        %1157 = vmatpush1.msra.mxu0 %v955
        %1158 = vmatprep.subr.mxu0 %v961
        %1159 = vmatpush1.msra.mxu0 %v959
        %1160 = vmatprep.subr.mxu0 %v965
        %1161 = vmatpush1.msra.mxu0 %v963
        %1162 = vmatprep.subr.mxu0 %v969
        %1163 = vmatpush1.msra.mxu0 %v967
        %1164 = vmatprep.subr.mxu0 %v973
        %1165 = vmatpush1.msra.mxu0 %v971
        %1166 = vmatprep.subr.mxu0 %v977
        %1167 = vmatpush1.msra.mxu0 %v975
        %1168 = vmatprep.subr.mxu0 %v981
        %1169 = vmatpush1.msra.mxu0 %v979
        %1170 = vmatprep.subr.mxu0 %v985
        %1171 = vmatpush1.msra.mxu0 %v983
        %1172 = vmatprep.subr.mxu0 %v989
        %1173 = vmatpush1.msra.mxu0 %v987
        %1174 = vmatprep.subr.mxu0 %v993
        %1175 = vmatpush1.msra.mxu0 %v991
        %1176 = vmatprep.subr.mxu0 %v997
        %1177 = vmatpush1.msra.mxu0 %v995
        %1178 = vmatprep.subr.mxu0 %v1001
        %1179 = vmatpush1.msra.mxu0 %v999
        %1180 = vmatprep.subr.mxu0 %v1005
        %1181 = vmatpush1.msra.mxu0 %v1003
        %1182 = vmatprep.subr.mxu0 %v1009
        %1183 = vmatpush1.msra.mxu0 %v1007
        %1184 = vmatprep.subr.mxu0 %v1013
        %1185 = vmatpush1.msra.mxu0 %v1011
        %1186 = vmatprep.subr.mxu0 %v1017
        %1187 = vmatpush1.msra.mxu0 %v1015
        %1188 = vmatprep.subr.mxu0 %v1021
        %1189 = vmatpush1.msra.mxu0 %v1019
        %1190 = vmatprep.subr.mxu0 %v1025
        %1191 = vmatpush1.msra.mxu0 %v1023
        %1192 = vmatprep.subr.mxu0 %v1029
        %1193 = vmatpush1.msra.mxu0 %v1027
        %1194 = vmatprep.subr.mxu0 %v1033
        %1195 = vmatpush1.msra.mxu0 %v1031
        %1196 = vmatprep.subr.mxu0 %v1037
        %1197 = vmatpush1.msra.mxu0 %v1035
        %1198 = vmatprep.subr.mxu0 %v1041
        %1199 = vmatpush1.msra.mxu0 %v1039
        %1200 = vmatprep.subr.mxu0 %v1045
        %1201 = vmatpush1.msra.mxu0 %v1043
        %1202 = vmatprep.subr.mxu0 %v1049
        %1203 = vmatpush1.msra.mxu0 %v1047
        %1204 = vmatprep.subr.mxu0 %v1053
        %1205 = vmatpush1.msra.mxu0 %v1051
        %1206 = vmatprep.subr.mxu0 %v1057
        %1207 = vmatpush1.msra.mxu0 %v1055
        %1208 = vmatprep.subr.mxu0 %v1061
        %1209 = vmatpush1.msra.mxu0 %v1059
        %1210 = vmatprep.subr.mxu0 %v1065
        %1211 = vmatpush1.msra.mxu0 %v1063
        %1212 = vmatprep.subr.mxu0 %v1069
        %1213 = vmatpush1.msra.mxu0 %v1067
        %1214 = vmatprep.subr.mxu0 %v1073
        %1215 = vmatpush1.msra.mxu0 %v1071
        %1216 = vmatprep.subr.mxu0 %v1077
        %1217 = vmatpush1.msra.mxu0 %v1075
        %1218 = vmatprep.subr.mxu0 %v1081
        %1219 = vmatpush1.msra.mxu0 %v1079
        %1220 = vmatprep.mubr.f32.mxu0 %v388
        %1221 = vmatmul.mubr.f32.gmra.mrb[0].mxu0 %v386
        %v1222 = vpop.f32.mrb[0].mxu0
        %v1223 = vadd.f32 0.0, %v1222
        %v1224 = vpop.f32.mrb[0].mxu0
        %v1225 = vadd.f32 0.0, %v1224
        %1226 = vdwg.mxu0
        %v1227 = vld [vmem:[%s3] sm:$0xf]
        %v1229 = vsel %vm462, %v1227, 0
        %1231 = vmatprep.subr.mxu0 %v1225
        %1232 = vmatpush1.msra.mxu0 %v1223
        %1233 = vmatprep.subr.mxu0 0.0
        %1234 = vmatpush1.msra.mxu0 0.0
        %1235 = vmatprep.subr.mxu0 0.0
        %1236 = vmatpush1.msra.mxu0 0.0
        %1237 = vmatprep.subr.mxu0 0.0
        %1238 = vmatpush1.msra.mxu0 0.0
        %1239 = vmatprep.subr.mxu0 0.0
        %1240 = vmatpush1.msra.mxu0 0.0
        %1241 = vmatprep.subr.mxu0 0.0
        %1242 = vmatpush1.msra.mxu0 0.0
        %1243 = vmatprep.subr.mxu0 0.0
        %1244 = vmatpush1.msra.mxu0 0.0
        %1245 = vmatprep.subr.mxu0 0.0
        %1246 = vmatpush1.msra.mxu0 0.0
        %1247 = vmatprep.subr.mxu0 0.0
        %1248 = vmatpush1.msra.mxu0 0.0
        %1249 = vmatprep.subr.mxu0 0.0
        %1250 = vmatpush1.msra.mxu0 0.0
        %1251 = vmatprep.subr.mxu0 0.0
        %1252 = vmatpush1.msra.mxu0 0.0
        %1253 = vmatprep.subr.mxu0 0.0
        %1254 = vmatpush1.msra.mxu0 0.0
        %1255 = vmatprep.subr.mxu0 0.0
        %1256 = vmatpush1.msra.mxu0 0.0
        %1257 = vmatprep.subr.mxu0 0.0
        %1258 = vmatpush1.msra.mxu0 0.0
        %1259 = vmatprep.subr.mxu0 0.0
        %1260 = vmatpush1.msra.mxu0 0.0
        %1261 = vmatprep.subr.mxu0 0.0
        %1262 = vmatpush1.msra.mxu0 0.0
        %1263 = vmatprep.subr.mxu0 0.0
        %1264 = vmatpush1.msra.mxu0 0.0
        %1265 = vmatprep.subr.mxu0 0.0
        %1266 = vmatpush1.msra.mxu0 0.0
        %1267 = vmatprep.subr.mxu0 0.0
        %1268 = vmatpush1.msra.mxu0 0.0
        %1269 = vmatprep.subr.mxu0 0.0
        %1270 = vmatpush1.msra.mxu0 0.0
        %1271 = vmatprep.subr.mxu0 0.0
        %1272 = vmatpush1.msra.mxu0 0.0
        %1273 = vmatprep.subr.mxu0 0.0
        %1274 = vmatpush1.msra.mxu0 0.0
        %1275 = vmatprep.subr.mxu0 0.0
        %1276 = vmatpush1.msra.mxu0 0.0
        %1277 = vmatprep.subr.mxu0 0.0
        %1278 = vmatpush1.msra.mxu0 0.0
        %1279 = vmatprep.subr.mxu0 0.0
        %1280 = vmatpush1.msra.mxu0 0.0
        %1281 = vmatprep.subr.mxu0 0.0
        %1282 = vmatpush1.msra.mxu0 0.0
        %1283 = vmatprep.subr.mxu0 0.0
        %1284 = vmatpush1.msra.mxu0 0.0
        %1285 = vmatprep.subr.mxu0 0.0
        %1286 = vmatpush1.msra.mxu0 0.0
        %1287 = vmatprep.subr.mxu0 0.0
        %1288 = vmatpush1.msra.mxu0 0.0
        %1289 = vmatprep.subr.mxu0 0.0
        %1290 = vmatpush1.msra.mxu0 0.0
        %1291 = vmatprep.subr.mxu0 0.0
        %1292 = vmatpush1.msra.mxu0 0.0
        %1293 = vmatprep.subr.mxu0 0.0
        %1294 = vmatpush1.msra.mxu0 0.0
        %1295 = vmatprep.mubr.f32.mxu0 0.0
        %1296 = vmatmul.mubr.f32.gmra.mrb[0].mxu0 %v1229
        %v1297 = vpop.f32.mrb[0].mxu0
        %v1298 = vadd.f32 0.0, %v1297
        %v1299 = vpop.f32.mrb[0].mxu0
        %v1300 = vadd.f32 0.0, %v1299
        %1301 = vdwg.mxu0
        %v1302 = vrcp.pop %v1118
        %v1303 = vrcp.pop %v1155
        %v1304 = vmul.f32 %v1298, %v1302
        %v1305 = vmul.f32 %v1300, %v1303
        %v1306 = vmul.f32 %v368, 0.35355338
        %v1307 = vmul.f32 %v370, 0.35355338
        %1308 = vxpose.xlu0.b32.start [1/16] %v380, 128
        %1309 = vxpose.xlu0.b32.cont [2/16] 0.0, 128
        %1310 = vxpose.xlu0.b32.cont [3/16] 0.0, 128
        %1311 = vxpose.xlu0.b32.cont [4/16] 0.0, 128
        %1312 = vxpose.xlu0.b32.cont [5/16] 0.0, 128
        %1313 = vxpose.xlu0.b32.cont [6/16] 0.0, 128
        %1314 = vxpose.xlu0.b32.cont [7/16] 0.0, 128
        %1315 = vxpose.xlu0.b32.cont [8/16] 0.0, 128
        %1316 = vxpose.xlu0.b32.cont [9/16] 0.0, 128
        %1317 = vxpose.xlu0.b32.cont [10/16] 0.0, 128
        %1318 = vxpose.xlu0.b32.cont [11/16] 0.0, 128
        %1319 = vxpose.xlu0.b32.cont [12/16] 0.0, 128
        %1320 = vxpose.xlu0.b32.cont [13/16] 0.0, 128
        %1321 = vxpose.xlu0.b32.cont [14/16] 0.0, 128
        %1322 = vxpose.xlu0.b32.cont [15/16] 0.0, 128
        %1323 = vxpose.xlu0.b32.end [16/16] 0.0, 128
        %v1324 = vpop.trf.xlu0
        %v1325 = vpop.trf.xlu0
        %v1326 = vpop.trf.xlu0
        %v1327 = vpop.trf.xlu0
        %v1328 = vpop.trf.xlu0
        %v1329 = vpop.trf.xlu0
        %v1330 = vpop.trf.xlu0
        %v1331 = vpop.trf.xlu0
        %v1332 = vpop.trf.xlu0
        %v1333 = vpop.trf.xlu0
        %v1334 = vpop.trf.xlu0
        %v1335 = vpop.trf.xlu0
        %v1336 = vpop.trf.xlu0
        %v1337 = vpop.trf.xlu0
        %v1338 = vpop.trf.xlu0
        %v1339 = vpop.trf.xlu0
        %1340 = vxpose.xlu0.b32.start [1/16] %v382, 128
        %1341 = vxpose.xlu0.b32.cont [2/16] 0.0, 128
        %1342 = vxpose.xlu0.b32.cont [3/16] 0.0, 128
        %1343 = vxpose.xlu0.b32.cont [4/16] 0.0, 128
        %1344 = vxpose.xlu0.b32.cont [5/16] 0.0, 128
        %1345 = vxpose.xlu0.b32.cont [6/16] 0.0, 128
        %1346 = vxpose.xlu0.b32.cont [7/16] 0.0, 128
        %1347 = vxpose.xlu0.b32.cont [8/16] 0.0, 128
        %1348 = vxpose.xlu0.b32.cont [9/16] 0.0, 128
        %1349 = vxpose.xlu0.b32.cont [10/16] 0.0, 128
        %1350 = vxpose.xlu0.b32.cont [11/16] 0.0, 128
        %1351 = vxpose.xlu0.b32.cont [12/16] 0.0, 128
        %1352 = vxpose.xlu0.b32.cont [13/16] 0.0, 128
        %1353 = vxpose.xlu0.b32.cont [14/16] 0.0, 128
        %1354 = vxpose.xlu0.b32.cont [15/16] 0.0, 128
        %1355 = vxpose.xlu0.b32.end [16/16] 0.0, 128
        %v1356 = vpop.trf.xlu0
        %v1357 = vpop.trf.xlu0
        %v1358 = vpop.trf.xlu0
        %v1359 = vpop.trf.xlu0
        %v1360 = vpop.trf.xlu0
        %v1361 = vpop.trf.xlu0
        %v1362 = vpop.trf.xlu0
        %v1363 = vpop.trf.xlu0
        %v1364 = vpop.trf.xlu0
        %v1365 = vpop.trf.xlu0
        %v1366 = vpop.trf.xlu0
        %v1367 = vpop.trf.xlu0
        %v1368 = vpop.trf.xlu0
        %v1369 = vpop.trf.xlu0
        %v1370 = vpop.trf.xlu0
        %v1371 = vpop.trf.xlu0
        %v1373 = vsel %vm462, %v1324, 0
        %v1376 = vsel %vm462, %v1325, 0
        %v1379 = vsel %vm462, %v1326, 0
        %v1382 = vsel %vm462, %v1327, 0
        %v1385 = vsel %vm462, %v1328, 0
        %v1388 = vsel %vm462, %v1329, 0
        %v1391 = vsel %vm462, %v1330, 0
        %v1394 = vsel %vm462, %v1331, 0
        %v1397 = vsel %vm462, %v1332, 0
        %v1400 = vsel %vm462, %v1333, 0
        %v1403 = vsel %vm462, %v1334, 0
        %v1406 = vsel %vm462, %v1335, 0
        %v1409 = vsel %vm462, %v1336, 0
        %v1412 = vsel %vm462, %v1337, 0
        %v1415 = vsel %vm462, %v1338, 0
        %v1418 = vsel %vm462, %v1339, 0
        %v1421 = vsel %vm462, %v1356, 0
        %v1424 = vsel %vm462, %v1357, 0
        %v1427 = vsel %vm462, %v1358, 0
        %v1430 = vsel %vm462, %v1359, 0
        %v1433 = vsel %vm462, %v1360, 0
        %v1436 = vsel %vm462, %v1361, 0
        %v1439 = vsel %vm462, %v1362, 0
        %v1442 = vsel %vm462, %v1363, 0
        %v1445 = vsel %vm462, %v1364, 0
        %v1448 = vsel %vm462, %v1365, 0
        %v1451 = vsel %vm462, %v1366, 0
        %v1454 = vsel %vm462, %v1367, 0
        %v1457 = vsel %vm462, %v1368, 0
        %v1460 = vsel %vm462, %v1369, 0
        %v1463 = vsel %vm462, %v1370, 0
        %v1466 = vsel %vm462, %v1371, 0
        %1468 = vmatprep.subr.mxu0 %v1307
        %1469 = vmatpush1.msra.mxu0 %v1306
        %1470 = vmatprep.subr.mxu0 0.0
        %1471 = vmatpush1.msra.mxu0 0.0
        %1472 = vmatprep.subr.mxu0 0.0
        %1473 = vmatpush1.msra.mxu0 0.0
        %1474 = vmatprep.subr.mxu0 0.0
        %1475 = vmatpush1.msra.mxu0 0.0
        %1476 = vmatprep.subr.mxu0 0.0
        %1477 = vmatpush1.msra.mxu0 0.0
        %1478 = vmatprep.subr.mxu0 0.0
        %1479 = vmatpush1.msra.mxu0 0.0
        %1480 = vmatprep.subr.mxu0 0.0
        %1481 = vmatpush1.msra.mxu0 0.0
        %1482 = vmatprep.subr.mxu0 0.0
        %1483 = vmatpush1.msra.mxu0 0.0
        %1484 = vmatprep.subr.mxu0 0.0
        %1485 = vmatpush1.msra.mxu0 0.0
        %1486 = vmatprep.subr.mxu0 0.0
        %1487 = vmatpush1.msra.mxu0 0.0
        %1488 = vmatprep.subr.mxu0 0.0
        %1489 = vmatpush1.msra.mxu0 0.0
        %1490 = vmatprep.subr.mxu0 0.0
        %1491 = vmatpush1.msra.mxu0 0.0
        %1492 = vmatprep.subr.mxu0 0.0
        %1493 = vmatpush1.msra.mxu0 0.0
        %1494 = vmatprep.subr.mxu0 0.0
        %1495 = vmatpush1.msra.mxu0 0.0
        %1496 = vmatprep.subr.mxu0 0.0
        %1497 = vmatpush1.msra.mxu0 0.0
        %1498 = vmatprep.subr.mxu0 0.0
        %1499 = vmatpush1.msra.mxu0 0.0
        %1500 = vmatprep.subr.mxu0 0.0
        %1501 = vmatpush1.msra.mxu0 0.0
        %1502 = vmatprep.subr.mxu0 0.0
        %1503 = vmatpush1.msra.mxu0 0.0
        %1504 = vmatprep.subr.mxu0 0.0
        %1505 = vmatpush1.msra.mxu0 0.0
        %1506 = vmatprep.subr.mxu0 0.0
        %1507 = vmatpush1.msra.mxu0 0.0
        %1508 = vmatprep.subr.mxu0 0.0
        %1509 = vmatpush1.msra.mxu0 0.0
        %1510 = vmatprep.subr.mxu0 0.0
        %1511 = vmatpush1.msra.mxu0 0.0
        %1512 = vmatprep.subr.mxu0 0.0
        %1513 = vmatpush1.msra.mxu0 0.0
        %1514 = vmatprep.subr.mxu0 0.0
        %1515 = vmatpush1.msra.mxu0 0.0
        %1516 = vmatprep.subr.mxu0 0.0
        %1517 = vmatpush1.msra.mxu0 0.0
        %1518 = vmatprep.subr.mxu0 0.0
        %1519 = vmatpush1.msra.mxu0 0.0
        %1520 = vmatprep.subr.mxu0 0.0
        %1521 = vmatpush1.msra.mxu0 0.0
        %1522 = vmatprep.subr.mxu0 0.0
        %1523 = vmatpush1.msra.mxu0 0.0
        %1524 = vmatprep.subr.mxu0 0.0
        %1525 = vmatpush1.msra.mxu0 0.0
        %1526 = vmatprep.subr.mxu0 0.0
        %1527 = vmatpush1.msra.mxu0 0.0
        %1528 = vmatprep.subr.mxu0 0.0
        %1529 = vmatpush1.msra.mxu0 0.0
        %1530 = vmatprep.subr.mxu0 0.0
        %1531 = vmatpush1.msra.mxu0 0.0
        %1532 = vmatprep.mubr.f32.mxu0 0.0
        %1533 = vmatmul.mubr.f32.gmra.mrb[0].mxu0 %v1373
        %v1534 = vpop.f32.mrb[0].mxu0
        %v1535 = vadd.f32 0.0, %v1534
        %v1536 = vpop.f32.mrb[0].mxu0
        %v1537 = vadd.f32 0.0, %v1536
        %1538 = vmatprep.mubr.f32.mxu0 0.0
        %1539 = vmatmul.mubr.f32.gmra.mrb[0].mxu0 %v1376
        %v1540 = vpop.f32.mrb[0].mxu0
        %v1541 = vadd.f32 0.0, %v1540
        %v1542 = vpop.f32.mrb[0].mxu0
        %v1543 = vadd.f32 0.0, %v1542
        %1544 = vmatprep.mubr.f32.mxu0 0.0
        %1545 = vmatmul.mubr.f32.gmra.mrb[0].mxu0 %v1379
        %v1546 = vpop.f32.mrb[0].mxu0
        %v1547 = vadd.f32 0.0, %v1546
        %v1548 = vpop.f32.mrb[0].mxu0
        %v1549 = vadd.f32 0.0, %v1548
        %1550 = vmatprep.mubr.f32.mxu0 0.0
        %1551 = vmatmul.mubr.f32.gmra.mrb[0].mxu0 %v1382
        %v1552 = vpop.f32.mrb[0].mxu0
        %v1553 = vadd.f32 0.0, %v1552
        %v1554 = vpop.f32.mrb[0].mxu0
        %v1555 = vadd.f32 0.0, %v1554
        %1556 = vmatprep.mubr.f32.mxu0 0.0
        %1557 = vmatmul.mubr.f32.gmra.mrb[0].mxu0 %v1385
        %v1558 = vpop.f32.mrb[0].mxu0
        %v1559 = vadd.f32 0.0, %v1558
        %v1560 = vpop.f32.mrb[0].mxu0
        %v1561 = vadd.f32 0.0, %v1560
        %1562 = vmatprep.mubr.f32.mxu0 0.0
        %1563 = vmatmul.mubr.f32.gmra.mrb[0].mxu0 %v1388
        %v1564 = vpop.f32.mrb[0].mxu0
        %v1565 = vadd.f32 0.0, %v1564
        %v1566 = vpop.f32.mrb[0].mxu0
        %v1567 = vadd.f32 0.0, %v1566
        %1568 = vmatprep.mubr.f32.mxu0 0.0
        %1569 = vmatmul.mubr.f32.gmra.mrb[0].mxu0 %v1391
        %v1570 = vpop.f32.mrb[0].mxu0
        %v1571 = vadd.f32 0.0, %v1570
        %v1572 = vpop.f32.mrb[0].mxu0
        %v1573 = vadd.f32 0.0, %v1572
        %1574 = vmatprep.mubr.f32.mxu0 0.0
        %1575 = vmatmul.mubr.f32.gmra.mrb[0].mxu0 %v1394
        %v1576 = vpop.f32.mrb[0].mxu0
        %v1577 = vadd.f32 0.0, %v1576
        %v1578 = vpop.f32.mrb[0].mxu0
        %v1579 = vadd.f32 0.0, %v1578
        %1580 = vmatprep.mubr.f32.mxu0 0.0
        %1581 = vmatmul.mubr.f32.gmra.mrb[0].mxu0 %v1397
        %v1582 = vpop.f32.mrb[0].mxu0
        %v1583 = vadd.f32 0.0, %v1582
        %v1584 = vpop.f32.mrb[0].mxu0
        %v1585 = vadd.f32 0.0, %v1584
        %1586 = vmatprep.mubr.f32.mxu0 0.0
        %1587 = vmatmul.mubr.f32.gmra.mrb[0].mxu0 %v1400
        %v1588 = vpop.f32.mrb[0].mxu0
        %v1589 = vadd.f32 0.0, %v1588
        %v1590 = vpop.f32.mrb[0].mxu0
        %v1591 = vadd.f32 0.0, %v1590
        %1592 = vmatprep.mubr.f32.mxu0 0.0
        %1593 = vmatmul.mubr.f32.gmra.mrb[0].mxu0 %v1403
        %v1594 = vpop.f32.mrb[0].mxu0
        %v1595 = vadd.f32 0.0, %v1594
        %v1596 = vpop.f32.mrb[0].mxu0
        %v1597 = vadd.f32 0.0, %v1596
        %1598 = vmatprep.mubr.f32.mxu0 0.0
        %1599 = vmatmul.mubr.f32.gmra.mrb[0].mxu0 %v1406
        %v1600 = vpop.f32.mrb[0].mxu0
        %v1601 = vadd.f32 0.0, %v1600
        %v1602 = vpop.f32.mrb[0].mxu0
        %v1603 = vadd.f32 0.0, %v1602
        %1604 = vmatprep.mubr.f32.mxu0 0.0
        %1605 = vmatmul.mubr.f32.gmra.mrb[0].mxu0 %v1409
        %v1606 = vpop.f32.mrb[0].mxu0
        %v1607 = vadd.f32 0.0, %v1606
        %v1608 = vpop.f32.mrb[0].mxu0
        %v1609 = vadd.f32 0.0, %v1608
        %1610 = vmatprep.mubr.f32.mxu0 0.0
        %1611 = vmatmul.mubr.f32.gmra.mrb[0].mxu0 %v1412
        %v1612 = vpop.f32.mrb[0].mxu0
        %v1613 = vadd.f32 0.0, %v1612
        %v1614 = vpop.f32.mrb[0].mxu0
        %v1615 = vadd.f32 0.0, %v1614
        %1616 = vmatprep.mubr.f32.mxu0 0.0
        %1617 = vmatmul.mubr.f32.gmra.mrb[0].mxu0 %v1415
        %v1618 = vpop.f32.mrb[0].mxu0
        %v1619 = vadd.f32 0.0, %v1618
        %v1620 = vpop.f32.mrb[0].mxu0
        %v1621 = vadd.f32 0.0, %v1620
        %1622 = vmatprep.mubr.f32.mxu0 0.0
        %1623 = vmatmul.mubr.f32.gmra.mrb[0].mxu0 %v1418
        %v1624 = vpop.f32.mrb[0].mxu0
        %v1625 = vadd.f32 0.0, %v1624
        %v1626 = vpop.f32.mrb[0].mxu0
        %v1627 = vadd.f32 0.0, %v1626
        %1628 = vmatprep.mubr.f32.mxu0 0.0
        %1629 = vmatmul.mubr.f32.gmra.mrb[0].mxu0 %v1421
        %v1630 = vpop.f32.mrb[0].mxu0
        %v1631 = vadd.f32 0.0, %v1630
        %v1632 = vpop.f32.mrb[0].mxu0
        %v1633 = vadd.f32 0.0, %v1632
        %1634 = vmatprep.mubr.f32.mxu0 0.0
        %1635 = vmatmul.mubr.f32.gmra.mrb[0].mxu0 %v1424
        %v1636 = vpop.f32.mrb[0].mxu0
        %v1637 = vadd.f32 0.0, %v1636
        %v1638 = vpop.f32.mrb[0].mxu0
        %v1639 = vadd.f32 0.0, %v1638
        %1640 = vmatprep.mubr.f32.mxu0 0.0
        %1641 = vmatmul.mubr.f32.gmra.mrb[0].mxu0 %v1427
        %v1642 = vpop.f32.mrb[0].mxu0
        %v1643 = vadd.f32 0.0, %v1642
        %v1644 = vpop.f32.mrb[0].mxu0
        %v1645 = vadd.f32 0.0, %v1644
        %1646 = vmatprep.mubr.f32.mxu0 0.0
        %1647 = vmatmul.mubr.f32.gmra.mrb[0].mxu0 %v1430
        %v1648 = vpop.f32.mrb[0].mxu0
        %v1649 = vadd.f32 0.0, %v1648
        %v1650 = vpop.f32.mrb[0].mxu0
        %v1651 = vadd.f32 0.0, %v1650
        %1652 = vmatprep.mubr.f32.mxu0 0.0
        %1653 = vmatmul.mubr.f32.gmra.mrb[0].mxu0 %v1433
        %v1654 = vpop.f32.mrb[0].mxu0
        %v1655 = vadd.f32 0.0, %v1654
        %v1656 = vpop.f32.mrb[0].mxu0
        %v1657 = vadd.f32 0.0, %v1656
        %1658 = vmatprep.mubr.f32.mxu0 0.0
        %1659 = vmatmul.mubr.f32.gmra.mrb[0].mxu0 %v1436
        %v1660 = vpop.f32.mrb[0].mxu0
        %v1661 = vadd.f32 0.0, %v1660
        %v1662 = vpop.f32.mrb[0].mxu0
        %v1663 = vadd.f32 0.0, %v1662
        %1664 = vmatprep.mubr.f32.mxu0 0.0
        %1665 = vmatmul.mubr.f32.gmra.mrb[0].mxu0 %v1439
        %v1666 = vpop.f32.mrb[0].mxu0
        %v1667 = vadd.f32 0.0, %v1666
        %v1668 = vpop.f32.mrb[0].mxu0
        %v1669 = vadd.f32 0.0, %v1668
        %1670 = vmatprep.mubr.f32.mxu0 0.0
        %1671 = vmatmul.mubr.f32.gmra.mrb[0].mxu0 %v1442
        %v1672 = vpop.f32.mrb[0].mxu0
        %v1673 = vadd.f32 0.0, %v1672
        %v1674 = vpop.f32.mrb[0].mxu0
        %v1675 = vadd.f32 0.0, %v1674
        %1676 = vmatprep.mubr.f32.mxu0 0.0
        %1677 = vmatmul.mubr.f32.gmra.mrb[0].mxu0 %v1445
        %v1678 = vpop.f32.mrb[0].mxu0
        %v1679 = vadd.f32 0.0, %v1678
        %v1680 = vpop.f32.mrb[0].mxu0
        %v1681 = vadd.f32 0.0, %v1680
        %1682 = vmatprep.mubr.f32.mxu0 0.0
        %1683 = vmatmul.mubr.f32.gmra.mrb[0].mxu0 %v1448
        %v1684 = vpop.f32.mrb[0].mxu0
        %v1685 = vadd.f32 0.0, %v1684
        %v1686 = vpop.f32.mrb[0].mxu0
        %v1687 = vadd.f32 0.0, %v1686
        %1688 = vmatprep.mubr.f32.mxu0 0.0
        %1689 = vmatmul.mubr.f32.gmra.mrb[0].mxu0 %v1451
        %v1690 = vpop.f32.mrb[0].mxu0
        %v1691 = vadd.f32 0.0, %v1690
        %v1692 = vpop.f32.mrb[0].mxu0
        %v1693 = vadd.f32 0.0, %v1692
        %1694 = vmatprep.mubr.f32.mxu0 0.0
        %1695 = vmatmul.mubr.f32.gmra.mrb[0].mxu0 %v1454
        %v1696 = vpop.f32.mrb[0].mxu0
        %v1697 = vadd.f32 0.0, %v1696
        %v1698 = vpop.f32.mrb[0].mxu0
        %v1699 = vadd.f32 0.0, %v1698
        %1700 = vmatprep.mubr.f32.mxu0 0.0
        %1701 = vmatmul.mubr.f32.gmra.mrb[0].mxu0 %v1457
        %v1702 = vpop.f32.mrb[0].mxu0
        %v1703 = vadd.f32 0.0, %v1702
        %v1704 = vpop.f32.mrb[0].mxu0
        %v1705 = vadd.f32 0.0, %v1704
        %1706 = vmatprep.mubr.f32.mxu0 0.0
        %1707 = vmatmul.mubr.f32.gmra.mrb[0].mxu0 %v1460
        %v1708 = vpop.f32.mrb[0].mxu0
        %v1709 = vadd.f32 0.0, %v1708
        %v1710 = vpop.f32.mrb[0].mxu0
        %v1711 = vadd.f32 0.0, %v1710
        %1712 = vmatprep.mubr.f32.mxu0 0.0
        %1713 = vmatmul.mubr.f32.gmra.mrb[0].mxu0 %v1463
        %v1714 = vpop.f32.mrb[0].mxu0
        %v1715 = vadd.f32 0.0, %v1714
        %v1716 = vpop.f32.mrb[0].mxu0
        %v1717 = vadd.f32 0.0, %v1716
        %1718 = vmatprep.mubr.f32.mxu0 0.0
        %1719 = vmatmul.mubr.f32.gmra.mrb[0].mxu0 %v1466
        %v1720 = vpop.f32.mrb[0].mxu0
        %v1721 = vadd.f32 0.0, %v1720
        %v1722 = vpop.f32.mrb[0].mxu0
        %v1723 = vadd.f32 0.0, %v1722
        %1724 = vdwg.mxu0
        %v1725 = vmax.f32 %v1535, %v1547
        %v1726 = vmax.f32 %v1541, %v1553
        %v1727 = vmax.f32 %v1725, %v1559
        %v1728 = vmax.f32 %v1726, %v1565
        %v1729 = vmax.f32 %v1727, %v1571
        %v1730 = vmax.f32 %v1728, %v1577
        %v1731 = vmax.f32 %v1729, %v1583
        %v1732 = vmax.f32 %v1730, %v1589
        %v1733 = vmax.f32 %v1731, %v1595
        %v1734 = vmax.f32 %v1732, %v1601
        %v1735 = vmax.f32 %v1733, %v1607
        %v1736 = vmax.f32 %v1734, %v1613
        %v1737 = vmax.f32 %v1735, %v1619
        %v1738 = vmax.f32 %v1736, %v1625
        %v1739 = vmax.f32 %v1737, %v1631
        %v1740 = vmax.f32 %v1738, %v1637
        %v1741 = vmax.f32 %v1739, %v1643
        %v1742 = vmax.f32 %v1740, %v1649
        %v1743 = vmax.f32 %v1741, %v1655
        %v1744 = vmax.f32 %v1742, %v1661
        %v1745 = vmax.f32 %v1743, %v1667
        %v1746 = vmax.f32 %v1744, %v1673
        %v1747 = vmax.f32 %v1745, %v1679
        %v1748 = vmax.f32 %v1746, %v1685
        %v1749 = vmax.f32 %v1747, %v1691
        %v1750 = vmax.f32 %v1748, %v1697
        %v1751 = vmax.f32 %v1749, %v1703
        %v1752 = vmax.f32 %v1750, %v1709
        %v1753 = vmax.f32 %v1751, %v1715
        %v1754 = vmax.f32 %v1752, %v1721
        %v1755 = vmax.f32 %v1753, %v1754
        %v1756 = vrot.slane %v1755, 4
        %v1757 = vmax.f32 %v1755, %v1756
        %v1758 = vrot.slane %v1757, 2
        %v1759 = vmax.f32 %v1757, %v1758
        %v1760 = vrot.slane %v1759, 1
        %v1761 = vmax.f32 %v1759, %v1760
        %v1762 = vmax.f32 %v1537, %v1549
        %v1763 = vmax.f32 %v1543, %v1555
        %v1764 = vmax.f32 %v1762, %v1561
        %v1765 = vmax.f32 %v1763, %v1567
        %v1766 = vmax.f32 %v1764, %v1573
        %v1767 = vmax.f32 %v1765, %v1579
        %v1768 = vmax.f32 %v1766, %v1585
        %v1769 = vmax.f32 %v1767, %v1591
        %v1770 = vmax.f32 %v1768, %v1597
        %v1771 = vmax.f32 %v1769, %v1603
        %v1772 = vmax.f32 %v1770, %v1609
        %v1773 = vmax.f32 %v1771, %v1615
        %v1774 = vmax.f32 %v1772, %v1621
        %v1775 = vmax.f32 %v1773, %v1627
        %v1776 = vmax.f32 %v1774, %v1633
        %v1777 = vmax.f32 %v1775, %v1639
        %v1778 = vmax.f32 %v1776, %v1645
        %v1779 = vmax.f32 %v1777, %v1651
        %v1780 = vmax.f32 %v1778, %v1657
        %v1781 = vmax.f32 %v1779, %v1663
        %v1782 = vmax.f32 %v1780, %v1669
        %v1783 = vmax.f32 %v1781, %v1675
        %v1784 = vmax.f32 %v1782, %v1681
        %v1785 = vmax.f32 %v1783, %v1687
        %v1786 = vmax.f32 %v1784, %v1693
        %v1787 = vmax.f32 %v1785, %v1699
        %v1788 = vmax.f32 %v1786, %v1705
        %v1789 = vmax.f32 %v1787, %v1711
        %v1790 = vmax.f32 %v1788, %v1717
        %v1791 = vmax.f32 %v1789, %v1723
        %v1792 = vmax.f32 %v1790, %v1791
        %v1793 = vrot.slane %v1792, 4
        %v1794 = vmax.f32 %v1792, %v1793
        %v1795 = vrot.slane %v1794, 2
        %v1796 = vmax.f32 %v1794, %v1795
        %v1797 = vrot.slane %v1796, 1
        %v1798 = vmax.f32 %v1796, %v1797
        %v1799 = vsub.f32 %v1535, %v1761
        %v1800 = vsub.f32 %v1537, %v1798
        %v1801 = vsub.f32 %v1541, %v1761
        %v1802 = vsub.f32 %v1543, %v1798
        %v1803 = vsub.f32 %v1547, %v1761
        %v1804 = vsub.f32 %v1549, %v1798
        %v1805 = vsub.f32 %v1553, %v1761
        %v1806 = vsub.f32 %v1555, %v1798
        %v1807 = vsub.f32 %v1559, %v1761
        %v1808 = vsub.f32 %v1561, %v1798
        %v1809 = vsub.f32 %v1565, %v1761
        %v1810 = vsub.f32 %v1567, %v1798
        %v1811 = vsub.f32 %v1571, %v1761
        %v1812 = vsub.f32 %v1573, %v1798
        %v1813 = vsub.f32 %v1577, %v1761
        %v1814 = vsub.f32 %v1579, %v1798
        %v1815 = vsub.f32 %v1583, %v1761
        %v1816 = vsub.f32 %v1585, %v1798
        %v1817 = vsub.f32 %v1589, %v1761
        %v1818 = vsub.f32 %v1591, %v1798
        %v1819 = vsub.f32 %v1595, %v1761
        %v1820 = vsub.f32 %v1597, %v1798
        %v1821 = vsub.f32 %v1601, %v1761
        %v1822 = vsub.f32 %v1603, %v1798
        %v1823 = vsub.f32 %v1607, %v1761
        %v1824 = vsub.f32 %v1609, %v1798
        %v1825 = vsub.f32 %v1613, %v1761
        %v1826 = vsub.f32 %v1615, %v1798
        %v1827 = vsub.f32 %v1619, %v1761
        %v1828 = vsub.f32 %v1621, %v1798
        %v1829 = vsub.f32 %v1625, %v1761
        %v1830 = vsub.f32 %v1627, %v1798
        %v1831 = vsub.f32 %v1631, %v1761
        %v1832 = vsub.f32 %v1633, %v1798
        %v1833 = vsub.f32 %v1637, %v1761
        %v1834 = vsub.f32 %v1639, %v1798
        %v1835 = vsub.f32 %v1643, %v1761
        %v1836 = vsub.f32 %v1645, %v1798
        %v1837 = vsub.f32 %v1649, %v1761
        %v1838 = vsub.f32 %v1651, %v1798
        %v1839 = vsub.f32 %v1655, %v1761
        %v1840 = vsub.f32 %v1657, %v1798
        %v1841 = vsub.f32 %v1661, %v1761
        %v1842 = vsub.f32 %v1663, %v1798
        %v1843 = vsub.f32 %v1667, %v1761
        %v1844 = vsub.f32 %v1669, %v1798
        %v1845 = vsub.f32 %v1673, %v1761
        %v1846 = vsub.f32 %v1675, %v1798
        %v1847 = vsub.f32 %v1679, %v1761
        %v1848 = vsub.f32 %v1681, %v1798
        %v1849 = vsub.f32 %v1685, %v1761
        %v1850 = vsub.f32 %v1687, %v1798
        %v1851 = vsub.f32 %v1691, %v1761
        %v1852 = vsub.f32 %v1693, %v1798
        %v1853 = vsub.f32 %v1697, %v1761
        %v1854 = vsub.f32 %v1699, %v1798
        %v1855 = vsub.f32 %v1703, %v1761
        %v1856 = vsub.f32 %v1705, %v1798
        %v1857 = vsub.f32 %v1709, %v1761
        %v1858 = vsub.f32 %v1711, %v1798
        %v1859 = vsub.f32 %v1715, %v1761
        %v1860 = vsub.f32 %v1717, %v1798
        %v1861 = vsub.f32 %v1721, %v1761
        %v1862 = vsub.f32 %v1723, %v1798
        %v1863 = vmul.f32 %v1799, 1.442695
        %v1864 = vpow.pop %v1863
        %v1865 = vmul.f32 %v1800, 1.442695
        %v1866 = vpow.pop %v1865
        %v1867 = vmul.f32 %v1801, 1.442695
        %v1868 = vpow.pop %v1867
        %v1869 = vmul.f32 %v1802, 1.442695
        %v1870 = vpow.pop %v1869
        %v1871 = vmul.f32 %v1803, 1.442695
        %v1872 = vpow.pop %v1871
        %v1873 = vmul.f32 %v1804, 1.442695
        %v1874 = vpow.pop %v1873
        %v1875 = vmul.f32 %v1805, 1.442695
        %v1876 = vpow.pop %v1875
        %v1877 = vmul.f32 %v1806, 1.442695
        %v1878 = vpow.pop %v1877
        %v1879 = vmul.f32 %v1807, 1.442695
        %v1880 = vpow.pop %v1879
        %v1881 = vmul.f32 %v1808, 1.442695
        %v1882 = vpow.pop %v1881
        %v1883 = vmul.f32 %v1809, 1.442695
        %v1884 = vpow.pop %v1883
        %v1885 = vmul.f32 %v1810, 1.442695
        %v1886 = vpow.pop %v1885
        %v1887 = vmul.f32 %v1811, 1.442695
        %v1888 = vpow.pop %v1887
        %v1889 = vmul.f32 %v1812, 1.442695
        %v1890 = vpow.pop %v1889
        %v1891 = vmul.f32 %v1813, 1.442695
        %v1892 = vpow.pop %v1891
        %v1893 = vmul.f32 %v1814, 1.442695
        %v1894 = vpow.pop %v1893
        %v1895 = vmul.f32 %v1815, 1.442695
        %v1896 = vpow.pop %v1895
        %v1897 = vmul.f32 %v1816, 1.442695
        %v1898 = vpow.pop %v1897
        %v1899 = vmul.f32 %v1817, 1.442695
        %v1900 = vpow.pop %v1899
        %v1901 = vmul.f32 %v1818, 1.442695
        %v1902 = vpow.pop %v1901
        %v1903 = vmul.f32 %v1819, 1.442695
        %v1904 = vpow.pop %v1903
        %v1905 = vmul.f32 %v1820, 1.442695
        %v1906 = vpow.pop %v1905
        %v1907 = vmul.f32 %v1821, 1.442695
        %v1908 = vpow.pop %v1907
        %v1909 = vmul.f32 %v1822, 1.442695
        %v1910 = vpow.pop %v1909
        %v1911 = vmul.f32 %v1823, 1.442695
        %v1912 = vpow.pop %v1911
        %v1913 = vmul.f32 %v1824, 1.442695
        %v1914 = vpow.pop %v1913
        %v1915 = vmul.f32 %v1825, 1.442695
        %v1916 = vpow.pop %v1915
        %v1917 = vmul.f32 %v1826, 1.442695
        %v1918 = vpow.pop %v1917
        %v1919 = vmul.f32 %v1827, 1.442695
        %v1920 = vpow.pop %v1919
        %v1921 = vmul.f32 %v1828, 1.442695
        %v1922 = vpow.pop %v1921
        %v1923 = vmul.f32 %v1829, 1.442695
        %v1924 = vpow.pop %v1923
        %v1925 = vmul.f32 %v1830, 1.442695
        %v1926 = vpow.pop %v1925
        %v1927 = vmul.f32 %v1831, 1.442695
        %v1928 = vpow.pop %v1927
        %v1929 = vmul.f32 %v1832, 1.442695
        %v1930 = vpow.pop %v1929
        %v1931 = vmul.f32 %v1833, 1.442695
        %v1932 = vpow.pop %v1931
        %v1933 = vmul.f32 %v1834, 1.442695
        %v1934 = vpow.pop %v1933
        %v1935 = vmul.f32 %v1835, 1.442695
        %v1936 = vpow.pop %v1935
        %v1937 = vmul.f32 %v1836, 1.442695
        %v1938 = vpow.pop %v1937
        %v1939 = vmul.f32 %v1837, 1.442695
        %v1940 = vpow.pop %v1939
        %v1941 = vmul.f32 %v1838, 1.442695
        %v1942 = vpow.pop %v1941
        %v1943 = vmul.f32 %v1839, 1.442695
        %v1944 = vpow.pop %v1943
        %v1945 = vmul.f32 %v1840, 1.442695
        %v1946 = vpow.pop %v1945
        %v1947 = vmul.f32 %v1841, 1.442695
        %v1948 = vpow.pop %v1947
        %v1949 = vmul.f32 %v1842, 1.442695
        %v1950 = vpow.pop %v1949
        %v1951 = vmul.f32 %v1843, 1.442695
        %v1952 = vpow.pop %v1951
        %v1953 = vmul.f32 %v1844, 1.442695
        %v1954 = vpow.pop %v1953
        %v1955 = vmul.f32 %v1845, 1.442695
        %v1956 = vpow.pop %v1955
        %v1957 = vmul.f32 %v1846, 1.442695
        %v1958 = vpow.pop %v1957
        %v1959 = vmul.f32 %v1847, 1.442695
        %v1960 = vpow.pop %v1959
        %v1961 = vmul.f32 %v1848, 1.442695
        %v1962 = vpow.pop %v1961
        %v1963 = vmul.f32 %v1849, 1.442695
        %v1964 = vpow.pop %v1963
        %v1965 = vmul.f32 %v1850, 1.442695
        %v1966 = vpow.pop %v1965
        %v1967 = vmul.f32 %v1851, 1.442695
        %v1968 = vpow.pop %v1967
        %v1969 = vmul.f32 %v1852, 1.442695
        %v1970 = vpow.pop %v1969
        %v1971 = vmul.f32 %v1853, 1.442695
        %v1972 = vpow.pop %v1971
        %v1973 = vmul.f32 %v1854, 1.442695
        %v1974 = vpow.pop %v1973
        %v1975 = vmul.f32 %v1855, 1.442695
        %v1976 = vpow.pop %v1975
        %v1977 = vmul.f32 %v1856, 1.442695
        %v1978 = vpow.pop %v1977
        %v1979 = vmul.f32 %v1857, 1.442695
        %v1980 = vpow.pop %v1979
        %v1981 = vmul.f32 %v1858, 1.442695
        %v1982 = vpow.pop %v1981
        %v1983 = vmul.f32 %v1859, 1.442695
        %v1984 = vpow.pop %v1983
        %v1985 = vmul.f32 %v1860, 1.442695
        %v1986 = vpow.pop %v1985
        %v1987 = vmul.f32 %v1861, 1.442695
        %v1988 = vpow.pop %v1987
        %v1989 = vmul.f32 %v1862, 1.442695
        %v1990 = vpow.pop %v1989
        %v1991 = vadd.f32 %v1864, %v1868
        %v1992 = vadd.f32 %v1991, %v1872
        %v1993 = vadd.f32 %v1992, %v1876
        %v1994 = vadd.f32 %v1993, %v1880
        %v1995 = vadd.f32 %v1994, %v1884
        %v1996 = vadd.f32 %v1995, %v1888
        %v1997 = vadd.f32 %v1996, %v1892
        %v1998 = vadd.f32 %v1997, %v1896
        %v1999 = vadd.f32 %v1998, %v1900
        %v2000 = vadd.f32 %v1999, %v1904
        %v2001 = vadd.f32 %v2000, %v1908
        %v2002 = vadd.f32 %v2001, %v1912
        %v2003 = vadd.f32 %v2002, %v1916
        %v2004 = vadd.f32 %v2003, %v1920
        %v2005 = vadd.f32 %v2004, %v1924
        %v2006 = vadd.f32 %v2005, %v1928
        %v2007 = vadd.f32 %v2006, %v1932
        %v2008 = vadd.f32 %v2007, %v1936
        %v2009 = vadd.f32 %v2008, %v1940
        %v2010 = vadd.f32 %v2009, %v1944
        %v2011 = vadd.f32 %v2010, %v1948
        %v2012 = vadd.f32 %v2011, %v1952
        %v2013 = vadd.f32 %v2012, %v1956
        %v2014 = vadd.f32 %v2013, %v1960
        %v2015 = vadd.f32 %v2014, %v1964
        %v2016 = vadd.f32 %v2015, %v1968
        %v2017 = vadd.f32 %v2016, %v1972
        %v2018 = vadd.f32 %v2017, %v1976
        %v2019 = vadd.f32 %v2018, %v1980
        %v2020 = vadd.f32 %v2019, %v1984
        %v2021 = vadd.f32 %v2020, %v1988
        %v2022 = vrot.slane %v2021, 4
        %v2023 = vadd.f32 %v2021, %v2022
        %v2024 = vrot.slane %v2023, 2
        %v2025 = vadd.f32 %v2023, %v2024
        %v2026 = vrot.slane %v2025, 1
        %v2027 = vadd.f32 %v2025, %v2026
        %v2028 = vadd.f32 %v1866, %v1870
        %v2029 = vadd.f32 %v2028, %v1874
        %v2030 = vadd.f32 %v2029, %v1878
        %v2031 = vadd.f32 %v2030, %v1882
        %v2032 = vadd.f32 %v2031, %v1886
        %v2033 = vadd.f32 %v2032, %v1890
        %v2034 = vadd.f32 %v2033, %v1894
        %v2035 = vadd.f32 %v2034, %v1898
        %v2036 = vadd.f32 %v2035, %v1902
        %v2037 = vadd.f32 %v2036, %v1906
        %v2038 = vadd.f32 %v2037, %v1910
        %v2039 = vadd.f32 %v2038, %v1914
        %v2040 = vadd.f32 %v2039, %v1918
        %v2041 = vadd.f32 %v2040, %v1922
        %v2042 = vadd.f32 %v2041, %v1926
        %v2043 = vadd.f32 %v2042, %v1930
        %v2044 = vadd.f32 %v2043, %v1934
        %v2045 = vadd.f32 %v2044, %v1938
        %v2046 = vadd.f32 %v2045, %v1942
        %v2047 = vadd.f32 %v2046, %v1946
        %v2048 = vadd.f32 %v2047, %v1950
        %v2049 = vadd.f32 %v2048, %v1954
        %v2050 = vadd.f32 %v2049, %v1958
        %v2051 = vadd.f32 %v2050, %v1962
        %v2052 = vadd.f32 %v2051, %v1966
        %v2053 = vadd.f32 %v2052, %v1970
        %v2054 = vadd.f32 %v2053, %v1974
        %v2055 = vadd.f32 %v2054, %v1978
        %v2056 = vadd.f32 %v2055, %v1982
        %v2057 = vadd.f32 %v2056, %v1986
        %v2058 = vadd.f32 %v2057, %v1990
        %v2059 = vrot.slane %v2058, 4
        %v2060 = vadd.f32 %v2058, %v2059
        %v2061 = vrot.slane %v2060, 2
        %v2062 = vadd.f32 %v2060, %v2061
        %v2063 = vrot.slane %v2062, 1
        %v2064 = vadd.f32 %v2062, %v2063
        %2065 = vmatprep.subr.mxu0 %v1866
        %2066 = vmatpush1.msra.mxu0 %v1864
        %2067 = vmatprep.subr.mxu0 %v1870
        %2068 = vmatpush1.msra.mxu0 %v1868
        %2069 = vmatprep.subr.mxu0 %v1874
        %2070 = vmatpush1.msra.mxu0 %v1872
        %2071 = vmatprep.subr.mxu0 %v1878
        %2072 = vmatpush1.msra.mxu0 %v1876
        %2073 = vmatprep.subr.mxu0 %v1882
        %2074 = vmatpush1.msra.mxu0 %v1880
        %2075 = vmatprep.subr.mxu0 %v1886
        %2076 = vmatpush1.msra.mxu0 %v1884
        %2077 = vmatprep.subr.mxu0 %v1890
        %2078 = vmatpush1.msra.mxu0 %v1888
        %2079 = vmatprep.subr.mxu0 %v1894
        %2080 = vmatpush1.msra.mxu0 %v1892
        %2081 = vmatprep.subr.mxu0 %v1898
        %2082 = vmatpush1.msra.mxu0 %v1896
        %2083 = vmatprep.subr.mxu0 %v1902
        %2084 = vmatpush1.msra.mxu0 %v1900
        %2085 = vmatprep.subr.mxu0 %v1906
        %2086 = vmatpush1.msra.mxu0 %v1904
        %2087 = vmatprep.subr.mxu0 %v1910
        %2088 = vmatpush1.msra.mxu0 %v1908
        %2089 = vmatprep.subr.mxu0 %v1914
        %2090 = vmatpush1.msra.mxu0 %v1912
        %2091 = vmatprep.subr.mxu0 %v1918
        %2092 = vmatpush1.msra.mxu0 %v1916
        %2093 = vmatprep.subr.mxu0 %v1922
        %2094 = vmatpush1.msra.mxu0 %v1920
        %2095 = vmatprep.subr.mxu0 %v1926
        %2096 = vmatpush1.msra.mxu0 %v1924
        %2097 = vmatprep.subr.mxu0 %v1930
        %2098 = vmatpush1.msra.mxu0 %v1928
        %2099 = vmatprep.subr.mxu0 %v1934
        %2100 = vmatpush1.msra.mxu0 %v1932
        %2101 = vmatprep.subr.mxu0 %v1938
        %2102 = vmatpush1.msra.mxu0 %v1936
        %2103 = vmatprep.subr.mxu0 %v1942
        %2104 = vmatpush1.msra.mxu0 %v1940
        %2105 = vmatprep.subr.mxu0 %v1946
        %2106 = vmatpush1.msra.mxu0 %v1944
        %2107 = vmatprep.subr.mxu0 %v1950
        %2108 = vmatpush1.msra.mxu0 %v1948
        %2109 = vmatprep.subr.mxu0 %v1954
        %2110 = vmatpush1.msra.mxu0 %v1952
        %2111 = vmatprep.subr.mxu0 %v1958
        %2112 = vmatpush1.msra.mxu0 %v1956
        %2113 = vmatprep.subr.mxu0 %v1962
        %2114 = vmatpush1.msra.mxu0 %v1960
        %2115 = vmatprep.subr.mxu0 %v1966
        %2116 = vmatpush1.msra.mxu0 %v1964
        %2117 = vmatprep.subr.mxu0 %v1970
        %2118 = vmatpush1.msra.mxu0 %v1968
        %2119 = vmatprep.subr.mxu0 %v1974
        %2120 = vmatpush1.msra.mxu0 %v1972
        %2121 = vmatprep.subr.mxu0 %v1978
        %2122 = vmatpush1.msra.mxu0 %v1976
        %2123 = vmatprep.subr.mxu0 %v1982
        %2124 = vmatpush1.msra.mxu0 %v1980
        %2125 = vmatprep.subr.mxu0 %v1986
        %2126 = vmatpush1.msra.mxu0 %v1984
        %2127 = vmatprep.subr.mxu0 %v1990
        %2128 = vmatpush1.msra.mxu0 %v1988
        %2129 = vmatprep.mubr.f32.mxu0 %v394
        %2130 = vmatmul.mubr.f32.gmra.mrb[0].mxu0 %v392
        %v2131 = vpop.f32.mrb[0].mxu0
        %v2132 = vadd.f32 0.0, %v2131
        %v2133 = vpop.f32.mrb[0].mxu0
        %v2134 = vadd.f32 0.0, %v2133
        %2135 = vdwg.mxu0
        %s2136 = scalar_lea.vmem %s3, 4
        %v2137 = vld [vmem:[%s2136] sm:$0xf]
        %v2139 = vsel %vm462, %v2137, 0
        %2141 = vmatprep.subr.mxu0 %v2134
        %2142 = vmatpush1.msra.mxu0 %v2132
        %2143 = vmatprep.subr.mxu0 0.0
        %2144 = vmatpush1.msra.mxu0 0.0
        %2145 = vmatprep.subr.mxu0 0.0
        %2146 = vmatpush1.msra.mxu0 0.0
        %2147 = vmatprep.subr.mxu0 0.0
        %2148 = vmatpush1.msra.mxu0 0.0
        %2149 = vmatprep.subr.mxu0 0.0
        %2150 = vmatpush1.msra.mxu0 0.0
        %2151 = vmatprep.subr.mxu0 0.0
        %2152 = vmatpush1.msra.mxu0 0.0
        %2153 = vmatprep.subr.mxu0 0.0
        %2154 = vmatpush1.msra.mxu0 0.0
        %2155 = vmatprep.subr.mxu0 0.0
        %2156 = vmatpush1.msra.mxu0 0.0
        %2157 = vmatprep.subr.mxu0 0.0
        %2158 = vmatpush1.msra.mxu0 0.0
        %2159 = vmatprep.subr.mxu0 0.0
        %2160 = vmatpush1.msra.mxu0 0.0
        %2161 = vmatprep.subr.mxu0 0.0
        %2162 = vmatpush1.msra.mxu0 0.0
        %2163 = vmatprep.subr.mxu0 0.0
        %2164 = vmatpush1.msra.mxu0 0.0
        %2165 = vmatprep.subr.mxu0 0.0
        %2166 = vmatpush1.msra.mxu0 0.0
        %2167 = vmatprep.subr.mxu0 0.0
        %2168 = vmatpush1.msra.mxu0 0.0
        %2169 = vmatprep.subr.mxu0 0.0
        %2170 = vmatpush1.msra.mxu0 0.0
        %2171 = vmatprep.subr.mxu0 0.0
        %2172 = vmatpush1.msra.mxu0 0.0
        %2173 = vmatprep.subr.mxu0 0.0
        %2174 = vmatpush1.msra.mxu0 0.0
        %2175 = vmatprep.subr.mxu0 0.0
        %2176 = vmatpush1.msra.mxu0 0.0
        %2177 = vmatprep.subr.mxu0 0.0
        %2178 = vmatpush1.msra.mxu0 0.0
        %2179 = vmatprep.subr.mxu0 0.0
        %2180 = vmatpush1.msra.mxu0 0.0
        %2181 = vmatprep.subr.mxu0 0.0
        %2182 = vmatpush1.msra.mxu0 0.0
        %2183 = vmatprep.subr.mxu0 0.0
        %2184 = vmatpush1.msra.mxu0 0.0
        %2185 = vmatprep.subr.mxu0 0.0
        %2186 = vmatpush1.msra.mxu0 0.0
        %2187 = vmatprep.subr.mxu0 0.0
        %2188 = vmatpush1.msra.mxu0 0.0
        %2189 = vmatprep.subr.mxu0 0.0
        %2190 = vmatpush1.msra.mxu0 0.0
        %2191 = vmatprep.subr.mxu0 0.0
        %2192 = vmatpush1.msra.mxu0 0.0
        %2193 = vmatprep.subr.mxu0 0.0
        %2194 = vmatpush1.msra.mxu0 0.0
        %2195 = vmatprep.subr.mxu0 0.0
        %2196 = vmatpush1.msra.mxu0 0.0
        %2197 = vmatprep.subr.mxu0 0.0
        %2198 = vmatpush1.msra.mxu0 0.0
        %2199 = vmatprep.subr.mxu0 0.0
        %2200 = vmatpush1.msra.mxu0 0.0
        %2201 = vmatprep.subr.mxu0 0.0
        %2202 = vmatpush1.msra.mxu0 0.0
        %2203 = vmatprep.subr.mxu0 0.0
        %2204 = vmatpush1.msra.mxu0 0.0
        %2205 = vmatprep.mubr.f32.mxu0 0.0
        %2206 = vmatmul.mubr.f32.gmra.mrb[0].mxu0 %v2139
        %v2207 = vpop.f32.mrb[0].mxu0
        %v2208 = vadd.f32 0.0, %v2207
        %v2209 = vpop.f32.mrb[0].mxu0
        %v2210 = vadd.f32 0.0, %v2209
        %2211 = vdwg.mxu0
        %v2212 = vrcp.pop %v2027
        %v2213 = vrcp.pop %v2064
        %v2214 = vmul.f32 %v2208, %v2212
        %v2215 = vmul.f32 %v2210, %v2213
        %v2216 = vadd.f32 %v1304, %v2214
        %v2217 = vadd.f32 %v1305, %v2215
        %v2218 = vld [vmem:[%s4] sm:$0xf]
        %2220 = vset.pattern.permute.xlu0 0
        %2221 = vperm.xlu0 %2220, %v2218
        %v2222 = vpop.permute.xlu0 %2221
        %v2224 = vadd.f32 %v2216, %v2222
        %v2225 = vadd.f32 %v2217, %v2222
        %v2228 = vcombine.low %v2224, %v2225
        %2230 = vst [vmem:[%s218] sm:$0xff] %v2228
        %s2231 = sand.u32 %s137, 1
        %s2232 = scalar_lea.sflag [#allocation3], %s2231
        %s2233 = sand.u32 %s137, 1
        %s2234 = smul.addr %s2233, 8
        %s2235 = scalar_lea.vmem [#allocation2], %s2234
        // Predicated region
        $region41: #{tpu_custom_call.1} parent=39 // pred_check
          %p2236 = pneg %p147
        $region42: #{tpu_custom_call.1} parent=39 // pred_check_branch
          %2238 = sbr.rel (%p2236) target = $region44
        $region43: #{tpu_custom_call.1} parent=39 // pred_region
          %s2239 = smul.u32 2, %s19
          %s2241 = ssub.s32 128, 128
          %2242 = vsyncadd %s2232, %s2241
          %s2243 = smul.addr %s2239, 64
          %s2244 = scalar_lea.hbm %s5, %s2243
          %s2246 = sshll.u32 %s2235, 4
          %s2247 = int_to_ptr.vmem [resolvable:$true] %s2246
          %2249 = dma.vmem_to_hbm [thread:$0]  %s2247, 128, %s2244, %s2232
        $region44: #{tpu_custom_call.1} parent=39 // pred_fallthru
          _
      $region40: #{tpu_custom_call.1} parent=5 // pred_fallthru
        _
      %p2250 = scmp.le.s32.totalorder 2, %s14
      // Predicated region
      $region45: #{tpu_custom_call.1} parent=5 // pred_check
        %p2251 = pneg %p2250
      $region46: #{tpu_custom_call.1} parent=5 // pred_check_branch
        %2253 = sbr.rel (%p2251) target = $region48
      $region47: #{tpu_custom_call.1} parent=5 // pred_region
        %s2254 = ssub.s32 %s14, 2
        // Predicated region
        $region49: #{tpu_custom_call.1} parent=47 // pred_check
          %p2255 = pneg %p153
        $region50: #{tpu_custom_call.1} parent=47 // pred_check_branch
          %2257 = sbr.rel (%p2255) target = $region52
        $region51: #{tpu_custom_call.1} parent=47 // pred_region
          %s2258 = sand.u32 %s138, 1
          %s2259 = scalar_lea.sflag [#allocation3], %s2258
          %s2260 = sand.u32 %s138, 1
          %s2261 = smul.addr %s2260, 8
          %s2262 = scalar_lea.vmem [#allocation2], %s2261
          %2263 = dma.done %s2259, 128
        $region52: #{tpu_custom_call.1} parent=47 // pred_fallthru
          _
      $region48: #{tpu_custom_call.1} parent=5 // pred_fallthru
        _
    $region6: #{tpu_custom_call.1} parent=1 // loop_footer
      %s18 = sadd.s32 1, %s14
    $region7: #{tpu_custom_call.1} parent=1 // loop_footer_branch
      %13 = sbr.rel target = $region3
    $region8: #{tpu_custom_call.1} parent=1 // loop_exit
      _
    %2264 = vsyncpa [#allocation3], 1
    %s2265 = scalar_lea.sflag [#allocation3], 1
    %2266 = vsyncpa %s2265, 1

</llo_original>
